<compile_context>
chip_gen: v7x
topology: tpu7x:2x2x1
jax: 0.10.0
libtpu: 0.0.40
codegen_flags: <defaults>
</compile_context>

<pallas_src>
import jax
import jax.numpy as jnp
import numpy as np
from jax import lax
from jax.experimental import pallas as pl
from jax.experimental.pallas import tpu as pltpu

# ---------------- configuration (small, consistent with the module) ---------
B, T = 2, 8                  # batch, sequence length
D = 4                        # input_size
H = 32                       # lstm_hidden_size
LSTM_LAYERS = 1              # single LSTM layer (dropout-between-layers N/A)
TCN_CHANNELS = (16, 16)      # tcn_channels
K = 2                        # tcn_kernel_size
O = 1                        # output_size
PH = 3                       # pred_horizon
PHO = O * PH
C0, C1 = TCN_CHANNELS
C_LAST = TCN_CHANNELS[-1]
BP = 8                       # batch padded to one full sublane group
TBP = T * BP                 # time-major flattened rows (row = t*BP + b)
NPAD = 128                   # lane-dense output / slab width


# ---------------- parameter slab layout (static, shared by host & kernel) ---
def _align8(n):
    return (n + 7) & ~7


# (name, rows_read, cols_read)  -- cols_read may exceed the packed width
# (remaining lanes are zero in the slab, which keeps the fc output lane-dense).
_PARAM_LAYOUT = (
    ("wih", D,          4 * H),   # (4, 128)  LSTM input weights (transposed)
    ("whh", H,          4 * H),   # (32, 128) LSTM recurrent weights (transposed)
    ("bl",  1,          4 * H),   # (1, 128)  combined LSTM bias
    ("w1a", 2 * D,      C0),      # conv taps stacked: [w_tap0; w_tap1]
    ("b1a", 1,          C0),
    ("w2a", 2 * C0,     C0),
    ("b2a", 1,          C0),
    ("wda", D,          C0),      # 1x1 downsample
    ("bda", 1,          C0),
    ("w1b", 2 * C0,     C1),
    ("b1b", 1,          C1),
    ("w2b", 2 * C1,     C1),
    ("b2b", 1,          C1),
    ("wfc", H + C_LAST, NPAD),    # fused fc weight [wfl; wft], lane-padded
    ("bfc", 1,          NPAD),    # fc bias, lane-padded
)
_OFFSETS = {}
_off = 0
for _name, _rows, _cols in _PARAM_LAYOUT:
    _OFFSETS[_name] = _off
    _off += _align8(_rows)
SLAB_ROWS = _off             # 256 rows x 128 lanes x f32 = 128 KiB


# ------------------------------- the kernel ---------------------------------
def forecaster_kernel(x_ref, p_ref, out_ref):
    x = x_ref[...]                                    # (TBP, D) time-major

    def P(name, rows, cols):                          # static slab slice
        off = _OFFSETS[name]
        return p_ref[off:off + rows, 0:cols]

    # ---- LSTM (gate order i, f, g, o), batched over BP, unrolled over T ----
    wih = P("wih", D, 4 * H)
    whh = P("whh", H, 4 * H)                          # stays resident in VMEM
    bl = P("bl", 1, 4 * H)
    xw = jnp.dot(x, wih, preferred_element_type=jnp.float32) + bl   # (TBP, 4H)

    h = jnp.zeros((BP, H), jnp.float32)
    c = jnp.zeros((BP, H), jnp.float32)
    for t in range(T):                                # static unroll (T=8)
        gates = xw[t * BP:(t + 1) * BP, :] + jnp.dot(
            h, whh, preferred_element_type=jnp.float32
        )                                             # (BP, 4H) = one vreg
        sig = jax.nn.sigmoid(gates)                   # one full-width EUP pass
        tnh = jnp.tanh(gates)                         # one full-width EUP pass
        i_g = sig[:, 0:H]
        f_g = sig[:, H:2 * H]
        o_g = sig[:, 3 * H:4 * H]
        g_g = tnh[:, 2 * H:3 * H]
        c = f_g * c + i_g * g_g
        h = o_g * jnp.tanh(c)
    h_last = h                                        # (BP, H)

    # ---- TCN (dropout = identity at inference) ----
    # Causal shift by `d` time steps == shift by d*BP rows on the time-major
    # flattened layout (row = t*BP + b); rows with t < d become zero.
    # Implemented as sublane-aligned zero-rows + static slice (no MXU, no S
    # matrices, deterministic semantics).
    def shift(a, d):
        s = d * BP
        return jnp.concatenate(
            [jnp.zeros((s, a.shape[1]), jnp.float32), a[0:TBP - s, :]], axis=0)

    def causal_conv(a, w_name, b_name, cin, cout, d):
        # single matmul: [shifted | current] @ [w_tap0; w_tap1] + b
        w = P(w_name, 2 * cin, cout)
        b = P(b_name, 1, cout)
        inp = jnp.concatenate([shift(a, d), a], axis=1)        # (TBP, 2*cin)
        return jnp.dot(inp, w, preferred_element_type=jnp.float32) + b

    # block 0 (dilation 1, 1x1 downsample residual since D != C0)
    h1 = jax.nn.relu(causal_conv(x, "w1a", "b1a", D, C0, 1))
    h2 = jax.nn.relu(causal_conv(h1, "w2a", "b2a", C0, C0, 1))
    res0 = (jnp.dot(x, P("wda", D, C0), preferred_element_type=jnp.float32)
            + P("bda", 1, C0))
    a1 = jax.nn.relu(h2 + res0)

    # block 1 (dilation 2, identity residual)
    h3 = jax.nn.relu(causal_conv(a1, "w1b", "b1b", C0, C1, 2))
    h4 = jax.nn.relu(causal_conv(h3, "w2b", "b2b", C1, C1, 2))
    a2 = jax.nn.relu(h4 + a1)
    tcn_last = a2[(T - 1) * BP:TBP, :]                # (BP, C_LAST), rows t = T-1

    # ---- fused fc on concat([lstm_last, tcn_last]) (lane-padded weight) ----
    comb = jnp.concatenate([h_last, tcn_last], axis=1)          # (BP, H+C_LAST)
    out = (jnp.dot(comb, P("wfc", H + C_LAST, NPAD),
                   preferred_element_type=jnp.float32)
           + P("bfc", 1, NPAD))
    out_ref[...] = out                                # (BP, NPAD) lane-dense store


# ------------------------------ wrapper --------------------------------------
def _pack_params(params):
    """Pack all kernel parameters into one (SLAB_ROWS, NPAD) f32 slab."""
    (wih_T, whh_T, bl,
     w1a, b1a, w2a, b2a, wda, bda,
     w1b, b1b, w2b, b2b,
     wfl, wft, bfc) = params

    def stack_taps(w):                       # (K, Cin, Cout) -> (2*Cin, Cout)
        return jnp.concatenate([w[0], w[1]], axis=0)

    entries = {
        "wih": wih_T, "whh": whh_T, "bl": bl,
        "w1a": stack_taps(w1a), "b1a": b1a,
        "w2a": stack_taps(w2a), "b2a": b2a,
        "wda": wda, "bda": bda,
        "w1b": stack_taps(w1b), "b1b": b1b,
        "w2b": stack_taps(w2b), "b2b": b2b,
        "wfc": jnp.concatenate([wfl, wft], axis=0),   # (H+C_LAST, PHO)
        "bfc": bfc,                                   # (1, PHO)
    }
    blocks = []
    for name, rows, _cols in _PARAM_LAYOUT:
        a = entries[name].astype(jnp.float32)
        blocks.append(jnp.pad(a, ((0, _align8(rows) - a.shape[0]),
                                  (0, NPAD - a.shape[1]))))
    return jnp.concatenate(blocks, axis=0)            # (SLAB_ROWS, NPAD)


@jax.jit
def run_forecaster(x, params):
    # pad batch to BP (zero rows), time-major flatten: row = t*BP + b
    x_pad = jnp.pad(x.astype(jnp.float32), ((0, BP - B), (0, 0), (0, 0)))
    x_flat = jnp.swapaxes(x_pad, 0, 1).reshape(TBP, D)

    slab = _pack_params(params)

    vmem = pl.BlockSpec(memory_space=pltpu.MemorySpace.VMEM)
    out = pl.pallas_call(
        forecaster_kernel,
        out_shape=jax.ShapeDtypeStruct((BP, NPAD), jnp.float32),
        in_specs=[vmem, vmem],
        out_specs=vmem,
    )(x_flat, slab)

    out = out[:B, :PHO].reshape(B, PH, O)
    return jnp.squeeze(out, axis=-1) if O == 1 else out   # matches .squeeze(-1)


# ----------------------- deterministic parameter init ------------------------
def init_params(key):
    keys = jax.random.split(key, 32)
    ki = iter(keys)
    u = lambda k, shape, scale: jax.random.uniform(k, shape, jnp.float32, -scale, scale)

    # LSTM (PyTorch-style shapes: weight_ih (4H, D), weight_hh (4H, H))
    s = 1.0 / np.sqrt(H)
    w_ih = u(next(ki), (4 * H, D), s)
    w_hh = u(next(ki), (4 * H, H), s)
    b_ih = u(next(ki), (4 * H,), s)
    b_hh = u(next(ki), (4 * H,), s)
    wih_T = w_ih.T                         # (D, 4H)
    whh_T = w_hh.T                         # (H, 4H)
    bl = (b_ih + b_hh)[None, :]            # (1, 4H)

    def wn_conv(kv, kg, kb, cout, cin):
        # weight_norm: w = g * v / ||v||  (norm over (cin, k) per out channel)
        v = 0.1 * jax.random.normal(kv, (cout, cin, K), jnp.float32)
        g = jax.random.uniform(kg, (cout,), jnp.float32, 0.5, 1.5)
        w = g[:, None, None] * v / jnp.sqrt(jnp.sum(v * v, axis=(1, 2), keepdims=True))
        b = u(kb, (cout,), 1.0 / np.sqrt(cin * K))
        return jnp.transpose(w, (2, 1, 0)), b[None, :]   # (K, Cin, Cout), (1, Cout)

    # block 0: Cin=D, Cout=16, dilation=1, has 1x1 downsample
    w1a, b1a = wn_conv(next(ki), next(ki), next(ki), TCN_CHANNELS[0], D)
    w2a, b2a = wn_conv(next(ki), next(ki), next(ki), TCN_CHANNELS[0], TCN_CHANNELS[0])
    wd_full = 0.01 * jax.random.normal(next(ki), (TCN_CHANNELS[0], D, 1), jnp.float32)
    wda = wd_full[:, :, 0].T                               # (D, Cout)
    bda = u(next(ki), (TCN_CHANNELS[0],), 1.0 / np.sqrt(D))[None, :]

    # block 1: Cin=Cout=16, dilation=2, identity residual
    w1b, b1b = wn_conv(next(ki), next(ki), next(ki), TCN_CHANNELS[1], TCN_CHANNELS[0])
    w2b, b2b = wn_conv(next(ki), next(ki), next(ki), TCN_CHANNELS[1], TCN_CHANNELS[1])

    # fc: Linear(H + C_LAST, PHO), weight split over the concat boundary
    sfc = 1.0 / np.sqrt(H + C_LAST)
    w_fc = u(next(ki), (PHO, H + C_LAST), sfc)
    b_fc = u(next(ki), (PHO,), sfc)
    wfl = w_fc[:, :H].T                    # (H, PHO)
    wft = w_fc[:, H:].T                    # (C_LAST, PHO)
    bfc = b_fc[None, :]                    # (1, PHO)

    return [wih_T, whh_T, bl,
            w1a, b1a, w2a, b2a, wda, bda,
            w1b, b1b, w2b, b2b,
            wfl, wft, bfc]


# --------------------------- pure-JAX reference ------------------------------
def ref_forward(x, params):
    (wih_T, whh_T, bl,
     w1a, b1a, w2a, b2a, wda, bda,
     w1b, b1b, w2b, b2b,
     wfl, wft, bfc) = params

    def lstm_step(carry, x_t):
        h, c = carry
        gates = x_t @ wih_T + h @ whh_T + bl
        i = jax.nn.sigmoid(gates[:, :H])
        f = jax.nn.sigmoid(gates[:, H:2 * H])
        g = jnp.tanh(gates[:, 2 * H:3 * H])
        o = jax.nn.sigmoid(gates[:, 3 * H:])
        c = f * c + i * g
        h = o * jnp.tanh(c)
        return (h, c), h

    h0 = jnp.zeros((B, H), jnp.float32)
    (h_last, _), _ = lax.scan(lstm_step, (h0, h0), jnp.swapaxes(x, 0, 1))

    def causal_conv(a, w, b, d):
        out = jnp.zeros((B, T, w.shape[-1]), jnp.float32)
        for j in range(K):
            s = (K - 1 - j) * d
            shifted = jnp.pad(a, ((0, 0), (s, 0), (0, 0)))[:, :T, :]
            out = out + shifted @ w[j]
        return out + b

    def block(a, w1, b1, w2, b2, wd, bd, d):
        h1 = jax.nn.relu(causal_conv(a, w1, b1, d))
        h2 = jax.nn.relu(causal_conv(h1, w2, b2, d))
        res = a if wd is None else a @ wd + bd
        return jax.nn.relu(h2 + res)

    a = block(x, w1a, b1a, w2a, b2a, wda, bda, 1)
    a = block(a, w1b, b1b, w2b, b2b, None, None, 2)
    tcn_last = a[:, -1, :]

    out = h_last @ wfl + tcn_last @ wft + bfc
    out = out.reshape(B, PH, O)
    return jnp.squeeze(out, -1) if O == 1 else out


# ----------------------------------- main ------------------------------------
if __name__ == "__main__":
    key = jax.random.PRNGKey(0)
    kx, kp = jax.random.split(key)
    x = jax.random.normal(kx, (B, T, D), jnp.float32)
    params = init_params(kp)

    y = jax.block_until_ready(run_forecaster(x, params))
    y_ref = jax.block_until_ready(ref_forward(x, params))

    assert y.shape == (B, PH), y.shape
    np.testing.assert_allclose(np.asarray(y), np.asarray(y_ref), rtol=1e-4, atol=1e-4)
    print("KERNEL_OK")
</pallas_src>

<mosaic_0001>
module attributes {stable_mosaic.version = 11 : i64} {
  func.func @forecaster_kernel(%arg0: memref<64x4xf32, #tpu.memory_space<vmem>>, %arg1: memref<256x128xf32, #tpu.memory_space<vmem>>, %arg2: memref<8x128xf32, #tpu.memory_space<vmem>>) attributes {dimension_semantics = [], scalar_prefetch = 0 : i64, scratch_operands = 0 : i64, tpu.core_type = #tpu.core_type<tc>} {
    %c0 = arith.constant 0 : index
    %c0_0 = arith.constant 0 : index
    %0 = vector.load %arg0[%c0, %c0_0] : memref<64x4xf32, #tpu.memory_space<vmem>>, vector<64x4xf32>
    %c0_1 = arith.constant 0 : index
    %c0_2 = arith.constant 0 : index
    %1 = vector.load %arg1[%c0_1, %c0_2] : memref<256x128xf32, #tpu.memory_space<vmem>>, vector<4x128xf32>
    %c8 = arith.constant 8 : index
    %c0_3 = arith.constant 0 : index
    %2 = vector.load %arg1[%c8, %c0_3] : memref<256x128xf32, #tpu.memory_space<vmem>>, vector<32x128xf32>
    %c40 = arith.constant 40 : index
    %c0_4 = arith.constant 0 : index
    %3 = vector.load %arg1[%c40, %c0_4] : memref<256x128xf32, #tpu.memory_space<vmem>>, vector<1x128xf32>
    %cst = arith.constant dense<0.000000e+00> : vector<64x128xf32>
    %4 = tpu.matmul %0, %1, %cst {dimension_numbers = #tpu.dot_dimension_numbers<[1], [0], [0], [1], [0, 0, 1, 1], [], []>} : vector<64x4xf32>, vector<4x128xf32>, vector<64x128xf32> -> vector<64x128xf32>
    %5 = vector.broadcast %3 : vector<1x128xf32> to vector<64x128xf32>
    %6 = arith.addf %4, %5 : vector<64x128xf32>
    %cst_5 = arith.constant 0.000000e+00 : f32
    %7 = vector.broadcast %cst_5 : f32 to vector<8x32xf32>
    %cst_6 = arith.constant 0.000000e+00 : f32
    %8 = vector.broadcast %cst_6 : f32 to vector<8x32xf32>
    %9 = vector.extract_strided_slice %6 {offsets = [0, 0], sizes = [8, 128], strides = [1, 1]} : vector<64x128xf32> to vector<8x128xf32>
    %cst_7 = arith.constant dense<0.000000e+00> : vector<8x128xf32>
    %10 = tpu.matmul %7, %2, %cst_7 {dimension_numbers = #tpu.dot_dimension_numbers<[1], [0], [0], [1], [0, 0, 1, 1], [], []>} : vector<8x32xf32>, vector<32x128xf32>, vector<8x128xf32> -> vector<8x128xf32>
    %11 = arith.addf %9, %10 : vector<8x128xf32>
    %12 = arith.negf %11 : vector<8x128xf32>
    %13 = math.exp %12 : vector<8x128xf32>
    %cst_8 = arith.constant 1.000000e+00 : f32
    %14 = vector.broadcast %cst_8 : f32 to vector<8x128xf32>
    %15 = arith.addf %14, %13 : vector<8x128xf32>
    %16 = arith.divf %14, %15 : vector<8x128xf32>
    %17 = math.tanh %11 : vector<8x128xf32>
    %18 = vector.extract_strided_slice %16 {offsets = [0, 0], sizes = [8, 32], strides = [1, 1]} : vector<8x128xf32> to vector<8x32xf32>
    %19 = vector.extract_strided_slice %16 {offsets = [0, 32], sizes = [8, 32], strides = [1, 1]} : vector<8x128xf32> to vector<8x32xf32>
    %20 = vector.extract_strided_slice %16 {offsets = [0, 96], sizes = [8, 32], strides = [1, 1]} : vector<8x128xf32> to vector<8x32xf32>
    %21 = vector.extract_strided_slice %17 {offsets = [0, 64], sizes = [8, 32], strides = [1, 1]} : vector<8x128xf32> to vector<8x32xf32>
    %22 = arith.mulf %19, %8 : vector<8x32xf32>
    %23 = arith.mulf %18, %21 : vector<8x32xf32>
    %24 = arith.addf %22, %23 : vector<8x32xf32>
    %25 = math.tanh %24 : vector<8x32xf32>
    %26 = arith.mulf %20, %25 : vector<8x32xf32>
    %27 = vector.extract_strided_slice %6 {offsets = [8, 0], sizes = [8, 128], strides = [1, 1]} : vector<64x128xf32> to vector<8x128xf32>
    %cst_9 = arith.constant dense<0.000000e+00> : vector<8x128xf32>
    %28 = tpu.matmul %26, %2, %cst_9 {dimension_numbers = #tpu.dot_dimension_numbers<[1], [0], [0], [1], [0, 0, 1, 1], [], []>} : vector<8x32xf32>, vector<32x128xf32>, vector<8x128xf32> -> vector<8x128xf32>
    %29 = arith.addf %27, %28 : vector<8x128xf32>
    %30 = arith.negf %29 : vector<8x128xf32>
    %31 = math.exp %30 : vector<8x128xf32>
    %cst_10 = arith.constant 1.000000e+00 : f32
    %32 = vector.broadcast %cst_10 : f32 to vector<8x128xf32>
    %33 = arith.addf %32, %31 : vector<8x128xf32>
    %34 = arith.divf %32, %33 : vector<8x128xf32>
    %35 = math.tanh %29 : vector<8x128xf32>
    %36 = vector.extract_strided_slice %34 {offsets = [0, 0], sizes = [8, 32], strides = [1, 1]} : vector<8x128xf32> to vector<8x32xf32>
    %37 = vector.extract_strided_slice %34 {offsets = [0, 32], sizes = [8, 32], strides = [1, 1]} : vector<8x128xf32> to vector<8x32xf32>
    %38 = vector.extract_strided_slice %34 {offsets = [0, 96], sizes = [8, 32], strides = [1, 1]} : vector<8x128xf32> to vector<8x32xf32>
    %39 = vector.extract_strided_slice %35 {offsets = [0, 64], sizes = [8, 32], strides = [1, 1]} : vector<8x128xf32> to vector<8x32xf32>
    %40 = arith.mulf %37, %24 : vector<8x32xf32>
    %41 = arith.mulf %36, %39 : vector<8x32xf32>
    %42 = arith.addf %40, %41 : vector<8x32xf32>
    %43 = math.tanh %42 : vector<8x32xf32>
    %44 = arith.mulf %38, %43 : vector<8x32xf32>
    %45 = vector.extract_strided_slice %6 {offsets = [16, 0], sizes = [8, 128], strides = [1, 1]} : vector<64x128xf32> to vector<8x128xf32>
    %cst_11 = arith.constant dense<0.000000e+00> : vector<8x128xf32>
    %46 = tpu.matmul %44, %2, %cst_11 {dimension_numbers = #tpu.dot_dimension_numbers<[1], [0], [0], [1], [0, 0, 1, 1], [], []>} : vector<8x32xf32>, vector<32x128xf32>, vector<8x128xf32> -> vector<8x128xf32>
    %47 = arith.addf %45, %46 : vector<8x128xf32>
    %48 = arith.negf %47 : vector<8x128xf32>
    %49 = math.exp %48 : vector<8x128xf32>
    %cst_12 = arith.constant 1.000000e+00 : f32
    %50 = vector.broadcast %cst_12 : f32 to vector<8x128xf32>
    %51 = arith.addf %50, %49 : vector<8x128xf32>
    %52 = arith.divf %50, %51 : vector<8x128xf32>
    %53 = math.tanh %47 : vector<8x128xf32>
    %54 = vector.extract_strided_slice %52 {offsets = [0, 0], sizes = [8, 32], strides = [1, 1]} : vector<8x128xf32> to vector<8x32xf32>
    %55 = vector.extract_strided_slice %52 {offsets = [0, 32], sizes = [8, 32], strides = [1, 1]} : vector<8x128xf32> to vector<8x32xf32>
    %56 = vector.extract_strided_slice %52 {offsets = [0, 96], sizes = [8, 32], strides = [1, 1]} : vector<8x128xf32> to vector<8x32xf32>
    %57 = vector.extract_strided_slice %53 {offsets = [0, 64], sizes = [8, 32], strides = [1, 1]} : vector<8x128xf32> to vector<8x32xf32>
    %58 = arith.mulf %55, %42 : vector<8x32xf32>
    %59 = arith.mulf %54, %57 : vector<8x32xf32>
    %60 = arith.addf %58, %59 : vector<8x32xf32>
    %61 = math.tanh %60 : vector<8x32xf32>
    %62 = arith.mulf %56, %61 : vector<8x32xf32>
    %63 = vector.extract_strided_slice %6 {offsets = [24, 0], sizes = [8, 128], strides = [1, 1]} : vector<64x128xf32> to vector<8x128xf32>
    %cst_13 = arith.constant dense<0.000000e+00> : vector<8x128xf32>
    %64 = tpu.matmul %62, %2, %cst_13 {dimension_numbers = #tpu.dot_dimension_numbers<[1], [0], [0], [1], [0, 0, 1, 1], [], []>} : vector<8x32xf32>, vector<32x128xf32>, vector<8x128xf32> -> vector<8x128xf32>
    %65 = arith.addf %63, %64 : vector<8x128xf32>
    %66 = arith.negf %65 : vector<8x128xf32>
    %67 = math.exp %66 : vector<8x128xf32>
    %cst_14 = arith.constant 1.000000e+00 : f32
    %68 = vector.broadcast %cst_14 : f32 to vector<8x128xf32>
    %69 = arith.addf %68, %67 : vector<8x128xf32>
    %70 = arith.divf %68, %69 : vector<8x128xf32>
    %71 = math.tanh %65 : vector<8x128xf32>
    %72 = vector.extract_strided_slice %70 {offsets = [0, 0], sizes = [8, 32], strides = [1, 1]} : vector<8x128xf32> to vector<8x32xf32>
    %73 = vector.extract_strided_slice %70 {offsets = [0, 32], sizes = [8, 32], strides = [1, 1]} : vector<8x128xf32> to vector<8x32xf32>
    %74 = vector.extract_strided_slice %70 {offsets = [0, 96], sizes = [8, 32], strides = [1, 1]} : vector<8x128xf32> to vector<8x32xf32>
    %75 = vector.extract_strided_slice %71 {offsets = [0, 64], sizes = [8, 32], strides = [1, 1]} : vector<8x128xf32> to vector<8x32xf32>
    %76 = arith.mulf %73, %60 : vector<8x32xf32>
    %77 = arith.mulf %72, %75 : vector<8x32xf32>
    %78 = arith.addf %76, %77 : vector<8x32xf32>
    %79 = math.tanh %78 : vector<8x32xf32>
    %80 = arith.mulf %74, %79 : vector<8x32xf32>
    %81 = vector.extract_strided_slice %6 {offsets = [32, 0], sizes = [8, 128], strides = [1, 1]} : vector<64x128xf32> to vector<8x128xf32>
    %cst_15 = arith.constant dense<0.000000e+00> : vector<8x128xf32>
    %82 = tpu.matmul %80, %2, %cst_15 {dimension_numbers = #tpu.dot_dimension_numbers<[1], [0], [0], [1], [0, 0, 1, 1], [], []>} : vector<8x32xf32>, vector<32x128xf32>, vector<8x128xf32> -> vector<8x128xf32>
    %83 = arith.addf %81, %82 : vector<8x128xf32>
    %84 = arith.negf %83 : vector<8x128xf32>
    %85 = math.exp %84 : vector<8x128xf32>
    %cst_16 = arith.constant 1.000000e+00 : f32
    %86 = vector.broadcast %cst_16 : f32 to vector<8x128xf32>
    %87 = arith.addf %86, %85 : vector<8x128xf32>
    %88 = arith.divf %86, %87 : vector<8x128xf32>
    %89 = math.tanh %83 : vector<8x128xf32>
    %90 = vector.extract_strided_slice %88 {offsets = [0, 0], sizes = [8, 32], strides = [1, 1]} : vector<8x128xf32> to vector<8x32xf32>
    %91 = vector.extract_strided_slice %88 {offsets = [0, 32], sizes = [8, 32], strides = [1, 1]} : vector<8x128xf32> to vector<8x32xf32>
    %92 = vector.extract_strided_slice %88 {offsets = [0, 96], sizes = [8, 32], strides = [1, 1]} : vector<8x128xf32> to vector<8x32xf32>
    %93 = vector.extract_strided_slice %89 {offsets = [0, 64], sizes = [8, 32], strides = [1, 1]} : vector<8x128xf32> to vector<8x32xf32>
    %94 = arith.mulf %91, %78 : vector<8x32xf32>
    %95 = arith.mulf %90, %93 : vector<8x32xf32>
    %96 = arith.addf %94, %95 : vector<8x32xf32>
    %97 = math.tanh %96 : vector<8x32xf32>
    %98 = arith.mulf %92, %97 : vector<8x32xf32>
    %99 = vector.extract_strided_slice %6 {offsets = [40, 0], sizes = [8, 128], strides = [1, 1]} : vector<64x128xf32> to vector<8x128xf32>
    %cst_17 = arith.constant dense<0.000000e+00> : vector<8x128xf32>
    %100 = tpu.matmul %98, %2, %cst_17 {dimension_numbers = #tpu.dot_dimension_numbers<[1], [0], [0], [1], [0, 0, 1, 1], [], []>} : vector<8x32xf32>, vector<32x128xf32>, vector<8x128xf32> -> vector<8x128xf32>
    %101 = arith.addf %99, %100 : vector<8x128xf32>
    %102 = arith.negf %101 : vector<8x128xf32>
    %103 = math.exp %102 : vector<8x128xf32>
    %cst_18 = arith.constant 1.000000e+00 : f32
    %104 = vector.broadcast %cst_18 : f32 to vector<8x128xf32>
    %105 = arith.addf %104, %103 : vector<8x128xf32>
    %106 = arith.divf %104, %105 : vector<8x128xf32>
    %107 = math.tanh %101 : vector<8x128xf32>
    %108 = vector.extract_strided_slice %106 {offsets = [0, 0], sizes = [8, 32], strides = [1, 1]} : vector<8x128xf32> to vector<8x32xf32>
    %109 = vector.extract_strided_slice %106 {offsets = [0, 32], sizes = [8, 32], strides = [1, 1]} : vector<8x128xf32> to vector<8x32xf32>
    %110 = vector.extract_strided_slice %106 {offsets = [0, 96], sizes = [8, 32], strides = [1, 1]} : vector<8x128xf32> to vector<8x32xf32>
    %111 = vector.extract_strided_slice %107 {offsets = [0, 64], sizes = [8, 32], strides = [1, 1]} : vector<8x128xf32> to vector<8x32xf32>
    %112 = arith.mulf %109, %96 : vector<8x32xf32>
    %113 = arith.mulf %108, %111 : vector<8x32xf32>
    %114 = arith.addf %112, %113 : vector<8x32xf32>
    %115 = math.tanh %114 : vector<8x32xf32>
    %116 = arith.mulf %110, %115 : vector<8x32xf32>
    %117 = vector.extract_strided_slice %6 {offsets = [48, 0], sizes = [8, 128], strides = [1, 1]} : vector<64x128xf32> to vector<8x128xf32>
    %cst_19 = arith.constant dense<0.000000e+00> : vector<8x128xf32>
    %118 = tpu.matmul %116, %2, %cst_19 {dimension_numbers = #tpu.dot_dimension_numbers<[1], [0], [0], [1], [0, 0, 1, 1], [], []>} : vector<8x32xf32>, vector<32x128xf32>, vector<8x128xf32> -> vector<8x128xf32>
    %119 = arith.addf %117, %118 : vector<8x128xf32>
    %120 = arith.negf %119 : vector<8x128xf32>
    %121 = math.exp %120 : vector<8x128xf32>
    %cst_20 = arith.constant 1.000000e+00 : f32
    %122 = vector.broadcast %cst_20 : f32 to vector<8x128xf32>
    %123 = arith.addf %122, %121 : vector<8x128xf32>
    %124 = arith.divf %122, %123 : vector<8x128xf32>
    %125 = math.tanh %119 : vector<8x128xf32>
    %126 = vector.extract_strided_slice %124 {offsets = [0, 0], sizes = [8, 32], strides = [1, 1]} : vector<8x128xf32> to vector<8x32xf32>
    %127 = vector.extract_strided_slice %124 {offsets = [0, 32], sizes = [8, 32], strides = [1, 1]} : vector<8x128xf32> to vector<8x32xf32>
    %128 = vector.extract_strided_slice %124 {offsets = [0, 96], sizes = [8, 32], strides = [1, 1]} : vector<8x128xf32> to vector<8x32xf32>
    %129 = vector.extract_strided_slice %125 {offsets = [0, 64], sizes = [8, 32], strides = [1, 1]} : vector<8x128xf32> to vector<8x32xf32>
    %130 = arith.mulf %127, %114 : vector<8x32xf32>
    %131 = arith.mulf %126, %129 : vector<8x32xf32>
    %132 = arith.addf %130, %131 : vector<8x32xf32>
    %133 = math.tanh %132 : vector<8x32xf32>
    %134 = arith.mulf %128, %133 : vector<8x32xf32>
    %135 = vector.extract_strided_slice %6 {offsets = [56, 0], sizes = [8, 128], strides = [1, 1]} : vector<64x128xf32> to vector<8x128xf32>
    %cst_21 = arith.constant dense<0.000000e+00> : vector<8x128xf32>
    %136 = tpu.matmul %134, %2, %cst_21 {dimension_numbers = #tpu.dot_dimension_numbers<[1], [0], [0], [1], [0, 0, 1, 1], [], []>} : vector<8x32xf32>, vector<32x128xf32>, vector<8x128xf32> -> vector<8x128xf32>
    %137 = arith.addf %135, %136 : vector<8x128xf32>
    %138 = arith.negf %137 : vector<8x128xf32>
    %139 = math.exp %138 : vector<8x128xf32>
    %cst_22 = arith.constant 1.000000e+00 : f32
    %140 = vector.broadcast %cst_22 : f32 to vector<8x128xf32>
    %141 = arith.addf %140, %139 : vector<8x128xf32>
    %142 = arith.divf %140, %141 : vector<8x128xf32>
    %143 = math.tanh %137 : vector<8x128xf32>
    %144 = vector.extract_strided_slice %142 {offsets = [0, 0], sizes = [8, 32], strides = [1, 1]} : vector<8x128xf32> to vector<8x32xf32>
    %145 = vector.extract_strided_slice %142 {offsets = [0, 32], sizes = [8, 32], strides = [1, 1]} : vector<8x128xf32> to vector<8x32xf32>
    %146 = vector.extract_strided_slice %142 {offsets = [0, 96], sizes = [8, 32], strides = [1, 1]} : vector<8x128xf32> to vector<8x32xf32>
    %147 = vector.extract_strided_slice %143 {offsets = [0, 64], sizes = [8, 32], strides = [1, 1]} : vector<8x128xf32> to vector<8x32xf32>
    %148 = arith.mulf %145, %132 : vector<8x32xf32>
    %149 = arith.mulf %144, %147 : vector<8x32xf32>
    %150 = arith.addf %148, %149 : vector<8x32xf32>
    %151 = math.tanh %150 : vector<8x32xf32>
    %152 = arith.mulf %146, %151 : vector<8x32xf32>
    %c48 = arith.constant 48 : index
    %c0_23 = arith.constant 0 : index
    %153 = vector.load %arg1[%c48, %c0_23] : memref<256x128xf32, #tpu.memory_space<vmem>>, vector<8x16xf32>
    %c56 = arith.constant 56 : index
    %c0_24 = arith.constant 0 : index
    %154 = vector.load %arg1[%c56, %c0_24] : memref<256x128xf32, #tpu.memory_space<vmem>>, vector<1x16xf32>
    %cst_25 = arith.constant 0.000000e+00 : f32
    %155 = vector.broadcast %cst_25 : f32 to vector<8x4xf32>
    %156 = vector.extract_strided_slice %0 {offsets = [0, 0], sizes = [56, 4], strides = [1, 1]} : vector<64x4xf32> to vector<56x4xf32>
    %157 = tpu.concatenate %155, %156 in 0 : vector<8x4xf32>, vector<56x4xf32> -> vector<64x4xf32>
    %158 = tpu.concatenate %157, %0 in 1 : vector<64x4xf32>, vector<64x4xf32> -> vector<64x8xf32>
    %cst_26 = arith.constant dense<0.000000e+00> : vector<64x16xf32>
    %159 = tpu.matmul %158, %153, %cst_26 {dimension_numbers = #tpu.dot_dimension_numbers<[1], [0], [0], [1], [0, 0, 1, 1], [], []>} : vector<64x8xf32>, vector<8x16xf32>, vector<64x16xf32> -> vector<64x16xf32>
    %160 = vector.broadcast %154 : vector<1x16xf32> to vector<64x16xf32>
    %161 = arith.addf %159, %160 : vector<64x16xf32>
    %cst_27 = arith.constant 0.000000e+00 : f32
    %162 = vector.broadcast %cst_27 : f32 to vector<64x16xf32>
    %163 = arith.maximumf %161, %162 : vector<64x16xf32>
    %c64 = arith.constant 64 : index
    %c0_28 = arith.constant 0 : index
    %164 = vector.load %arg1[%c64, %c0_28] : memref<256x128xf32, #tpu.memory_space<vmem>>, vector<32x16xf32>
    %c96 = arith.constant 96 : index
    %c0_29 = arith.constant 0 : index
    %165 = vector.load %arg1[%c96, %c0_29] : memref<256x128xf32, #tpu.memory_space<vmem>>, vector<1x16xf32>
    %cst_30 = arith.constant 0.000000e+00 : f32
    %166 = vector.broadcast %cst_30 : f32 to vector<8x16xf32>
    %167 = vector.extract_strided_slice %163 {offsets = [0, 0], sizes = [56, 16], strides = [1, 1]} : vector<64x16xf32> to vector<56x16xf32>
    %168 = tpu.concatenate %166, %167 in 0 : vector<8x16xf32>, vector<56x16xf32> -> vector<64x16xf32>
    %169 = tpu.concatenate %168, %163 in 1 : vector<64x16xf32>, vector<64x16xf32> -> vector<64x32xf32>
    %cst_31 = arith.constant dense<0.000000e+00> : vector<64x16xf32>
    %170 = tpu.matmul %169, %164, %cst_31 {dimension_numbers = #tpu.dot_dimension_numbers<[1], [0], [0], [1], [0, 0, 1, 1], [], []>} : vector<64x32xf32>, vector<32x16xf32>, vector<64x16xf32> -> vector<64x16xf32>
    %171 = vector.broadcast %165 : vector<1x16xf32> to vector<64x16xf32>
    %172 = arith.addf %170, %171 : vector<64x16xf32>
    %cst_32 = arith.constant 0.000000e+00 : f32
    %173 = vector.broadcast %cst_32 : f32 to vector<64x16xf32>
    %174 = arith.maximumf %172, %173 : vector<64x16xf32>
    %c104 = arith.constant 104 : index
    %c0_33 = arith.constant 0 : index
    %175 = vector.load %arg1[%c104, %c0_33] : memref<256x128xf32, #tpu.memory_space<vmem>>, vector<4x16xf32>
    %cst_34 = arith.constant dense<0.000000e+00> : vector<64x16xf32>
    %176 = tpu.matmul %0, %175, %cst_34 {dimension_numbers = #tpu.dot_dimension_numbers<[1], [0], [0], [1], [0, 0, 1, 1], [], []>} : vector<64x4xf32>, vector<4x16xf32>, vector<64x16xf32> -> vector<64x16xf32>
    %c112 = arith.constant 112 : index
    %c0_35 = arith.constant 0 : index
    %177 = vector.load %arg1[%c112, %c0_35] : memref<256x128xf32, #tpu.memory_space<vmem>>, vector<1x16xf32>
    %178 = vector.broadcast %177 : vector<1x16xf32> to vector<64x16xf32>
    %179 = arith.addf %176, %178 : vector<64x16xf32>
    %180 = arith.addf %174, %179 : vector<64x16xf32>
    %cst_36 = arith.constant 0.000000e+00 : f32
    %181 = vector.broadcast %cst_36 : f32 to vector<64x16xf32>
    %182 = arith.maximumf %180, %181 : vector<64x16xf32>
    %c120 = arith.constant 120 : index
    %c0_37 = arith.constant 0 : index
    %183 = vector.load %arg1[%c120, %c0_37] : memref<256x128xf32, #tpu.memory_space<vmem>>, vector<32x16xf32>
    %c152 = arith.constant 152 : index
    %c0_38 = arith.constant 0 : index
    %184 = vector.load %arg1[%c152, %c0_38] : memref<256x128xf32, #tpu.memory_space<vmem>>, vector<1x16xf32>
    %cst_39 = arith.constant 0.000000e+00 : f32
    %185 = vector.broadcast %cst_39 : f32 to vector<16x16xf32>
    %186 = vector.extract_strided_slice %182 {offsets = [0, 0], sizes = [48, 16], strides = [1, 1]} : vector<64x16xf32> to vector<48x16xf32>
    %187 = tpu.concatenate %185, %186 in 0 : vector<16x16xf32>, vector<48x16xf32> -> vector<64x16xf32>
    %188 = tpu.concatenate %187, %182 in 1 : vector<64x16xf32>, vector<64x16xf32> -> vector<64x32xf32>
    %cst_40 = arith.constant dense<0.000000e+00> : vector<64x16xf32>
    %189 = tpu.matmul %188, %183, %cst_40 {dimension_numbers = #tpu.dot_dimension_numbers<[1], [0], [0], [1], [0, 0, 1, 1], [], []>} : vector<64x32xf32>, vector<32x16xf32>, vector<64x16xf32> -> vector<64x16xf32>
    %190 = vector.broadcast %184 : vector<1x16xf32> to vector<64x16xf32>
    %191 = arith.addf %189, %190 : vector<64x16xf32>
    %cst_41 = arith.constant 0.000000e+00 : f32
    %192 = vector.broadcast %cst_41 : f32 to vector<64x16xf32>
    %193 = arith.maximumf %191, %192 : vector<64x16xf32>
    %c160 = arith.constant 160 : index
    %c0_42 = arith.constant 0 : index
    %194 = vector.load %arg1[%c160, %c0_42] : memref<256x128xf32, #tpu.memory_space<vmem>>, vector<32x16xf32>
    %c192 = arith.constant 192 : index
    %c0_43 = arith.constant 0 : index
    %195 = vector.load %arg1[%c192, %c0_43] : memref<256x128xf32, #tpu.memory_space<vmem>>, vector<1x16xf32>
    %cst_44 = arith.constant 0.000000e+00 : f32
    %196 = vector.broadcast %cst_44 : f32 to vector<16x16xf32>
    %197 = vector.extract_strided_slice %193 {offsets = [0, 0], sizes = [48, 16], strides = [1, 1]} : vector<64x16xf32> to vector<48x16xf32>
    %198 = tpu.concatenate %196, %197 in 0 : vector<16x16xf32>, vector<48x16xf32> -> vector<64x16xf32>
    %199 = tpu.concatenate %198, %193 in 1 : vector<64x16xf32>, vector<64x16xf32> -> vector<64x32xf32>
    %cst_45 = arith.constant dense<0.000000e+00> : vector<64x16xf32>
    %200 = tpu.matmul %199, %194, %cst_45 {dimension_numbers = #tpu.dot_dimension_numbers<[1], [0], [0], [1], [0, 0, 1, 1], [], []>} : vector<64x32xf32>, vector<32x16xf32>, vector<64x16xf32> -> vector<64x16xf32>
    %201 = vector.broadcast %195 : vector<1x16xf32> to vector<64x16xf32>
    %202 = arith.addf %200, %201 : vector<64x16xf32>
    %cst_46 = arith.constant 0.000000e+00 : f32
    %203 = vector.broadcast %cst_46 : f32 to vector<64x16xf32>
    %204 = arith.maximumf %202, %203 : vector<64x16xf32>
    %205 = arith.addf %204, %182 : vector<64x16xf32>
    %cst_47 = arith.constant 0.000000e+00 : f32
    %206 = vector.broadcast %cst_47 : f32 to vector<64x16xf32>
    %207 = arith.maximumf %205, %206 : vector<64x16xf32>
    %208 = vector.extract_strided_slice %207 {offsets = [56, 0], sizes = [8, 16], strides = [1, 1]} : vector<64x16xf32> to vector<8x16xf32>
    %209 = tpu.concatenate %152, %208 in 1 : vector<8x32xf32>, vector<8x16xf32> -> vector<8x48xf32>
    %c200 = arith.constant 200 : index
    %c0_48 = arith.constant 0 : index
    %210 = vector.load %arg1[%c200, %c0_48] : memref<256x128xf32, #tpu.memory_space<vmem>>, vector<48x128xf32>
    %cst_49 = arith.constant dense<0.000000e+00> : vector<8x128xf32>
    %211 = tpu.matmul %209, %210, %cst_49 {dimension_numbers = #tpu.dot_dimension_numbers<[1], [0], [0], [1], [0, 0, 1, 1], [], []>} : vector<8x48xf32>, vector<48x128xf32>, vector<8x128xf32> -> vector<8x128xf32>
    %c248 = arith.constant 248 : index
    %c0_50 = arith.constant 0 : index
    %212 = vector.load %arg1[%c248, %c0_50] : memref<256x128xf32, #tpu.memory_space<vmem>>, vector<1x128xf32>
    %213 = vector.broadcast %212 : vector<1x128xf32> to vector<8x128xf32>
    %214 = arith.addf %211, %213 : vector<8x128xf32>
    %c0_51 = arith.constant 0 : index
    %c0_52 = arith.constant 0 : index
    %215 = vector.load %arg2[%c0_51, %c0_52] : memref<8x128xf32, #tpu.memory_space<vmem>>, vector<8x128xf32>
    tpu.vector_store %arg2[%c0_51, %c0_52], %214 {strides = array<i32>} : memref<8x128xf32, #tpu.memory_space<vmem>>, vector<8x128xf32>,
    return
  }
}

</mosaic_0001>

<llo_original>
// kernel: run_forecaster.1
$region0: #{run_forecaster.1}
  #allocation0 [shape = 'u32[]', space=smem, size = 0x4, offset = 0x4, fixed_abs, tag = 'smem constant byte address 0x4 - core index']
  #allocation1 [shape = 'u32[144,128]{1,0:T(1,128)}', space=vmem, size = 0x12000, scoped, tag = 'internal scratch']
  %s0 = inlined_call_operand.vmem [shape: f32[64,4], index: 0, kind: input, shape index: {}]
  %s1 = inlined_call_operand.vmem [shape: f32[256,128], index: 1, kind: input, shape index: {}]
  %s2 = inlined_call_operand.vmem [shape: f32[8,128], index: 2, kind: output, shape index: {}]
  %s3 = sld [smem:[#allocation0]]
  $region18: #{run_forecaster.1} parent=0
    _
  %s5 = ssub.s32 1, %s3
  %s6 = scalar_select 0, %s5, %s3
  // Predicated region
  $region2: #{run_forecaster.1} parent=0 // pred_check
    _
  $region3: #{run_forecaster.1} parent=0 // pred_check_branch
    %8 = sbr.rel (0) target = $region5
  $region4: #{run_forecaster.1} parent=0 // pred_region
    _
  $region5: #{run_forecaster.1} parent=0 // pred_fallthru
    _
  // Predicated region
  $region6: #{run_forecaster.1} parent=0 // pred_check
    _
  $region7: #{run_forecaster.1} parent=0 // pred_check_branch
    %10 = sbr.rel (0) target = $region9
  $region8: #{run_forecaster.1} parent=0 // pred_region
    _
  $region9: #{run_forecaster.1} parent=0 // pred_fallthru
    _
  %v11 = vld [vmem:[%s0] sm:$0xff]
  %v12 = vld [vmem:[%s0 + $0x8] sm:$0xff]
  %v13 = vld [vmem:[%s0 + $0x10] sm:$0xff]
  %v14 = vld [vmem:[%s0 + $0x18] sm:$0xff]
  %v15 = vld [vmem:[%s0 + $0x20] sm:$0xff]
  %v16 = vld [vmem:[%s0 + $0x28] sm:$0xff]
  %v17 = vld [vmem:[%s0 + $0x30] sm:$0xff]
  %v18 = vld [vmem:[%s0 + $0x38] sm:$0xff]
  %v19 = vld [vmem:[%s1] sm:$0xf]
  %v20 = vld [vmem:[%s1 + $0x8] sm:$0xff]
  %v21 = vld [vmem:[%s1 + $0x10] sm:$0xff]
  %v22 = vld [vmem:[%s1 + $0x18] sm:$0xff]
  %v23 = vld [vmem:[%s1 + $0x20] sm:$0xff]
  %v24 = vld [vmem:[%s1 + $0x28] sm:$0x1]
  %v25 = vlaneseq
  %v26 = vshrl.u32 %v25, 7
  %v27 = vsub.s32 0, %v26
  %v28 = vrot.slane %v24, %v27
  %vm29 = vcmask 31744
  %v31 = vsel %vm29, %v11, 0
  %v34 = vsel %vm29, %v12, 0
  %v37 = vsel %vm29, %v13, 0
  %v40 = vsel %vm29, %v14, 0
  %v43 = vsel %vm29, %v15, 0
  %v46 = vsel %vm29, %v16, 0
  %v49 = vsel %vm29, %v17, 0
  %v52 = vsel %vm29, %v18, 0
  %vm54 = vcmask 1043456
  %v56 = vsel %vm54, %v19, 0
  %58 = vmatprep.subr.mxu0 0.0
  %59 = vmatpush1.msra.mxu0 %v56
  %60 = vmatprep.subr.mxu0 0.0
  %61 = vmatpush1.msra.mxu0 0.0
  %62 = vmatprep.subr.mxu0 0.0
  %63 = vmatpush1.msra.mxu0 0.0
  %64 = vmatprep.subr.mxu0 0.0
  %65 = vmatpush1.msra.mxu0 0.0
  %66 = vmatprep.subr.mxu0 0.0
  %67 = vmatpush1.msra.mxu0 0.0
  %68 = vmatprep.subr.mxu0 0.0
  %69 = vmatpush1.msra.mxu0 0.0
  %70 = vmatprep.subr.mxu0 0.0
  %71 = vmatpush1.msra.mxu0 0.0
  %72 = vmatprep.subr.mxu0 0.0
  %73 = vmatpush1.msra.mxu0 0.0
  %74 = vmatprep.subr.mxu0 0.0
  %75 = vmatpush1.msra.mxu0 0.0
  %76 = vmatprep.subr.mxu0 0.0
  %77 = vmatpush1.msra.mxu0 0.0
  %78 = vmatprep.subr.mxu0 0.0
  %79 = vmatpush1.msra.mxu0 0.0
  %80 = vmatprep.subr.mxu0 0.0
  %81 = vmatpush1.msra.mxu0 0.0
  %82 = vmatprep.subr.mxu0 0.0
  %83 = vmatpush1.msra.mxu0 0.0
  %84 = vmatprep.subr.mxu0 0.0
  %85 = vmatpush1.msra.mxu0 0.0
  %86 = vmatprep.subr.mxu0 0.0
  %87 = vmatpush1.msra.mxu0 0.0
  %88 = vmatprep.subr.mxu0 0.0
  %89 = vmatpush1.msra.mxu0 0.0
  %90 = vmatprep.subr.mxu0 0.0
  %91 = vmatpush1.msra.mxu0 0.0
  %92 = vmatprep.subr.mxu0 0.0
  %93 = vmatpush1.msra.mxu0 0.0
  %94 = vmatprep.subr.mxu0 0.0
  %95 = vmatpush1.msra.mxu0 0.0
  %96 = vmatprep.subr.mxu0 0.0
  %97 = vmatpush1.msra.mxu0 0.0
  %98 = vmatprep.subr.mxu0 0.0
  %99 = vmatpush1.msra.mxu0 0.0
  %100 = vmatprep.subr.mxu0 0.0
  %101 = vmatpush1.msra.mxu0 0.0
  %102 = vmatprep.subr.mxu0 0.0
  %103 = vmatpush1.msra.mxu0 0.0
  %104 = vmatprep.subr.mxu0 0.0
  %105 = vmatpush1.msra.mxu0 0.0
  %106 = vmatprep.subr.mxu0 0.0
  %107 = vmatpush1.msra.mxu0 0.0
  %108 = vmatprep.subr.mxu0 0.0
  %109 = vmatpush1.msra.mxu0 0.0
  %110 = vmatprep.subr.mxu0 0.0
  %111 = vmatpush1.msra.mxu0 0.0
  %112 = vmatprep.subr.mxu0 0.0
  %113 = vmatpush1.msra.mxu0 0.0
  %114 = vmatprep.subr.mxu0 0.0
  %115 = vmatpush1.msra.mxu0 0.0
  %116 = vmatprep.subr.mxu0 0.0
  %117 = vmatpush1.msra.mxu0 0.0
  %118 = vmatprep.subr.mxu0 0.0
  %119 = vmatpush1.msra.mxu0 0.0
  %120 = vmatprep.subr.mxu0 0.0
  %121 = vmatpush1.msra.mxu0 0.0
  %122 = vmatprep.mubr.f32.mxu0 0.0
  %123 = vmatmul.mubr.f32.gmra.mrb[0].mxu0 %v31
  %v124 = vpop.f32.mrb[0].mxu0
  %v125 = vadd.f32 %v28, %v124
  %v126 = vpop.f32.mrb[0].mxu0
  %127 = vmatprep.mubr.f32.mxu0 0.0
  %128 = vmatmul.mubr.f32.gmra.mrb[0].mxu0 %v34
  %v129 = vpop.f32.mrb[0].mxu0
  %v130 = vadd.f32 %v28, %v129
  %v131 = vpop.f32.mrb[0].mxu0
  %132 = vmatprep.mubr.f32.mxu0 0.0
  %133 = vmatmul.mubr.f32.gmra.mrb[0].mxu0 %v37
  %v134 = vpop.f32.mrb[0].mxu0
  %v135 = vadd.f32 %v28, %v134
  %v136 = vpop.f32.mrb[0].mxu0
  %137 = vmatprep.mubr.f32.mxu0 0.0
  %138 = vmatmul.mubr.f32.gmra.mrb[0].mxu0 %v40
  %v139 = vpop.f32.mrb[0].mxu0
  %v140 = vadd.f32 %v28, %v139
  %v141 = vpop.f32.mrb[0].mxu0
  %142 = vmatprep.mubr.f32.mxu0 0.0
  %143 = vmatmul.mubr.f32.gmra.mrb[0].mxu0 %v43
  %v144 = vpop.f32.mrb[0].mxu0
  %v145 = vadd.f32 %v28, %v144
  %v146 = vpop.f32.mrb[0].mxu0
  %147 = vmatprep.mubr.f32.mxu0 0.0
  %148 = vmatmul.mubr.f32.gmra.mrb[0].mxu0 %v46
  %v149 = vpop.f32.mrb[0].mxu0
  %v150 = vadd.f32 %v28, %v149
  %v151 = vpop.f32.mrb[0].mxu0
  %152 = vmatprep.mubr.f32.mxu0 0.0
  %153 = vmatmul.mubr.f32.gmra.mrb[0].mxu0 %v49
  %v154 = vpop.f32.mrb[0].mxu0
  %v155 = vadd.f32 %v28, %v154
  %v156 = vpop.f32.mrb[0].mxu0
  %157 = vmatprep.mubr.f32.mxu0 0.0
  %158 = vmatmul.mubr.f32.gmra.mrb[0].mxu0 %v52
  %v159 = vpop.f32.mrb[0].mxu0
  %v160 = vadd.f32 %v28, %v159
  %v161 = vpop.f32.mrb[0].mxu0
  %162 = vdwg.mxu0
  %vm163 = vcmask 261120
  %v165 = vsel %vm163, 0.0, 0
  %167 = vmatprep.subr.mxu0 0.0
  %168 = vmatpush1.msra.mxu0 %v20
  %169 = vmatprep.subr.mxu0 0.0
  %170 = vmatpush1.msra.mxu0 %v21
  %171 = vmatprep.subr.mxu0 0.0
  %172 = vmatpush1.msra.mxu0 %v22
  %173 = vmatprep.subr.mxu0 0.0
  %174 = vmatpush1.msra.mxu0 %v23
  %175 = vmatprep.subr.mxu0 0.0
  %176 = vmatpush1.msra.mxu0 0.0
  %177 = vmatprep.subr.mxu0 0.0
  %178 = vmatpush1.msra.mxu0 0.0
  %179 = vmatprep.subr.mxu0 0.0
  %180 = vmatpush1.msra.mxu0 0.0
  %181 = vmatprep.subr.mxu0 0.0
  %182 = vmatpush1.msra.mxu0 0.0
  %183 = vmatprep.subr.mxu0 0.0
  %184 = vmatpush1.msra.mxu0 0.0
  %185 = vmatprep.subr.mxu0 0.0
  %186 = vmatpush1.msra.mxu0 0.0
  %187 = vmatprep.subr.mxu0 0.0
  %188 = vmatpush1.msra.mxu0 0.0
  %189 = vmatprep.subr.mxu0 0.0
  %190 = vmatpush1.msra.mxu0 0.0
  %191 = vmatprep.subr.mxu0 0.0
  %192 = vmatpush1.msra.mxu0 0.0
  %193 = vmatprep.subr.mxu0 0.0
  %194 = vmatpush1.msra.mxu0 0.0
  %195 = vmatprep.subr.mxu0 0.0
  %196 = vmatpush1.msra.mxu0 0.0
  %197 = vmatprep.subr.mxu0 0.0
  %198 = vmatpush1.msra.mxu0 0.0
  %199 = vmatprep.subr.mxu0 0.0
  %200 = vmatpush1.msra.mxu0 0.0
  %201 = vmatprep.subr.mxu0 0.0
  %202 = vmatpush1.msra.mxu0 0.0
  %203 = vmatprep.subr.mxu0 0.0
  %204 = vmatpush1.msra.mxu0 0.0
  %205 = vmatprep.subr.mxu0 0.0
  %206 = vmatpush1.msra.mxu0 0.0
  %207 = vmatprep.subr.mxu0 0.0
  %208 = vmatpush1.msra.mxu0 0.0
  %209 = vmatprep.subr.mxu0 0.0
  %210 = vmatpush1.msra.mxu0 0.0
  %211 = vmatprep.subr.mxu0 0.0
  %212 = vmatpush1.msra.mxu0 0.0
  %213 = vmatprep.subr.mxu0 0.0
  %214 = vmatpush1.msra.mxu0 0.0
  %215 = vmatprep.subr.mxu0 0.0
  %216 = vmatpush1.msra.mxu0 0.0
  %217 = vmatprep.subr.mxu0 0.0
  %218 = vmatpush1.msra.mxu0 0.0
  %219 = vmatprep.subr.mxu0 0.0
  %220 = vmatpush1.msra.mxu0 0.0
  %221 = vmatprep.subr.mxu0 0.0
  %222 = vmatpush1.msra.mxu0 0.0
  %223 = vmatprep.subr.mxu0 0.0
  %224 = vmatpush1.msra.mxu0 0.0
  %225 = vmatprep.subr.mxu0 0.0
  %226 = vmatpush1.msra.mxu0 0.0
  %227 = vmatprep.subr.mxu0 0.0
  %228 = vmatpush1.msra.mxu0 0.0
  %229 = vmatprep.subr.mxu0 0.0
  %230 = vmatpush1.msra.mxu0 0.0
  %231 = vmatprep.mubr.f32.mxu0 0.0
  %232 = vmatmul.mubr.f32.gmra.mrb[0].mxu0 %v165
  %v233 = vpop.f32.mrb[0].mxu0
  %v234 = vadd.f32 0.0, %v233
  %v235 = vpop.f32.mrb[0].mxu0
  %236 = vdwg.mxu0
  %v237 = vadd.f32 %v125, %v234
  %v238 = vxor.u32 %v237, 2147483648
  %v239 = vmul.f32 %v238, 1.442695
  %v240 = vpow.pop %v239
  %v241 = vadd.f32 %v240, 1.0
  %v242 = vrcp.pop %v241
  %v243 = vmul.f32 1.0, %v242
  %v244 = vtanh.pop %v237
  %v245 = vmul.f32 %v243, 0.0
  %247 = vrot.lane.b32.xlu0 %v244, 64
  %v248 = vpop.permute.xlu0 %247
  %v250 = vmul.f32 %v243, %v248
  %252 = vrot.lane.b32.xlu0 %v250, 32
  %v253 = vpop.permute.xlu0 %252
  %v255 = vadd.f32 %v245, %v253
  %v256 = vtanh.pop %v255
  %258 = vrot.lane.b32.xlu0 %v256, 64
  %v259 = vpop.permute.xlu0 %258
  %v261 = vmul.f32 %v243, %v259
  %263 = vrot.lane.b32.xlu0 %v261, 32
  %v264 = vpop.permute.xlu0 %263
  %v265 = vsel %vm163, %v264, 0
  %267 = vmatprep.subr.mxu0 0.0
  %268 = vmatpush1.msra.mxu0 %v20
  %269 = vmatprep.subr.mxu0 0.0
  %270 = vmatpush1.msra.mxu0 %v21
  %271 = vmatprep.subr.mxu0 0.0
  %272 = vmatpush1.msra.mxu0 %v22
  %273 = vmatprep.subr.mxu0 0.0
  %274 = vmatpush1.msra.mxu0 %v23
  %275 = vmatprep.subr.mxu0 0.0
  %276 = vmatpush1.msra.mxu0 0.0
  %277 = vmatprep.subr.mxu0 0.0
  %278 = vmatpush1.msra.mxu0 0.0
  %279 = vmatprep.subr.mxu0 0.0
  %280 = vmatpush1.msra.mxu0 0.0
  %281 = vmatprep.subr.mxu0 0.0
  %282 = vmatpush1.msra.mxu0 0.0
  %283 = vmatprep.subr.mxu0 0.0
  %284 = vmatpush1.msra.mxu0 0.0
  %285 = vmatprep.subr.mxu0 0.0
  %286 = vmatpush1.msra.mxu0 0.0
  %287 = vmatprep.subr.mxu0 0.0
  %288 = vmatpush1.msra.mxu0 0.0
  %289 = vmatprep.subr.mxu0 0.0
  %290 = vmatpush1.msra.mxu0 0.0
  %291 = vmatprep.subr.mxu0 0.0
  %292 = vmatpush1.msra.mxu0 0.0
  %293 = vmatprep.subr.mxu0 0.0
  %294 = vmatpush1.msra.mxu0 0.0
  %295 = vmatprep.subr.mxu0 0.0
  %296 = vmatpush1.msra.mxu0 0.0
  %297 = vmatprep.subr.mxu0 0.0
  %298 = vmatpush1.msra.mxu0 0.0
  %299 = vmatprep.subr.mxu0 0.0
  %300 = vmatpush1.msra.mxu0 0.0
  %301 = vmatprep.subr.mxu0 0.0
  %302 = vmatpush1.msra.mxu0 0.0
  %303 = vmatprep.subr.mxu0 0.0
  %304 = vmatpush1.msra.mxu0 0.0
  %305 = vmatprep.subr.mxu0 0.0
  %306 = vmatpush1.msra.mxu0 0.0
  %307 = vmatprep.subr.mxu0 0.0
  %308 = vmatpush1.msra.mxu0 0.0
  %309 = vmatprep.subr.mxu0 0.0
  %310 = vmatpush1.msra.mxu0 0.0
  %311 = vmatprep.subr.mxu0 0.0
  %312 = vmatpush1.msra.mxu0 0.0
  %313 = vmatprep.subr.mxu0 0.0
  %314 = vmatpush1.msra.mxu0 0.0
  %315 = vmatprep.subr.mxu0 0.0
  %316 = vmatpush1.msra.mxu0 0.0
  %317 = vmatprep.subr.mxu0 0.0
  %318 = vmatpush1.msra.mxu0 0.0
  %319 = vmatprep.subr.mxu0 0.0
  %320 = vmatpush1.msra.mxu0 0.0
  %321 = vmatprep.subr.mxu0 0.0
  %322 = vmatpush1.msra.mxu0 0.0
  %323 = vmatprep.subr.mxu0 0.0
  %324 = vmatpush1.msra.mxu0 0.0
  %325 = vmatprep.subr.mxu0 0.0
  %326 = vmatpush1.msra.mxu0 0.0
  %327 = vmatprep.subr.mxu0 0.0
  %328 = vmatpush1.msra.mxu0 0.0
  %329 = vmatprep.subr.mxu0 0.0
  %330 = vmatpush1.msra.mxu0 0.0
  %331 = vmatprep.mubr.f32.mxu0 0.0
  %332 = vmatmul.mubr.f32.gmra.mrb[0].mxu0 %v265
  %v333 = vpop.f32.mrb[0].mxu0
  %v334 = vadd.f32 0.0, %v333
  %v335 = vpop.f32.mrb[0].mxu0
  %336 = vdwg.mxu0
  %v337 = vadd.f32 %v130, %v334
  %v338 = vxor.u32 %v337, 2147483648
  %v339 = vmul.f32 %v338, 1.442695
  %v340 = vpow.pop %v339
  %v341 = vadd.f32 %v340, 1.0
  %v342 = vrcp.pop %v341
  %v343 = vmul.f32 1.0, %v342
  %v344 = vtanh.pop %v337
  %v345 = vmul.f32 %v343, %v255
  %347 = vrot.lane.b32.xlu0 %v344, 64
  %v348 = vpop.permute.xlu0 %347
  %v350 = vmul.f32 %v343, %v348
  %352 = vrot.lane.b32.xlu0 %v350, 32
  %v353 = vpop.permute.xlu0 %352
  %v355 = vadd.f32 %v345, %v353
  %v356 = vtanh.pop %v355
  %358 = vrot.lane.b32.xlu0 %v356, 64
  %v359 = vpop.permute.xlu0 %358
  %v361 = vmul.f32 %v343, %v359
  %363 = vrot.lane.b32.xlu0 %v361, 32
  %v364 = vpop.permute.xlu0 %363
  %v365 = vsel %vm163, %v364, 0
  %367 = vmatprep.subr.mxu0 0.0
  %368 = vmatpush1.msra.mxu0 %v20
  %369 = vmatprep.subr.mxu0 0.0
  %370 = vmatpush1.msra.mxu0 %v21
  %371 = vmatprep.subr.mxu0 0.0
  %372 = vmatpush1.msra.mxu0 %v22
  %373 = vmatprep.subr.mxu0 0.0
  %374 = vmatpush1.msra.mxu0 %v23
  %375 = vmatprep.subr.mxu0 0.0
  %376 = vmatpush1.msra.mxu0 0.0
  %377 = vmatprep.subr.mxu0 0.0
  %378 = vmatpush1.msra.mxu0 0.0
  %379 = vmatprep.subr.mxu0 0.0
  %380 = vmatpush1.msra.mxu0 0.0
  %381 = vmatprep.subr.mxu0 0.0
  %382 = vmatpush1.msra.mxu0 0.0
  %383 = vmatprep.subr.mxu0 0.0
  %384 = vmatpush1.msra.mxu0 0.0
  %385 = vmatprep.subr.mxu0 0.0
  %386 = vmatpush1.msra.mxu0 0.0
  %387 = vmatprep.subr.mxu0 0.0
  %388 = vmatpush1.msra.mxu0 0.0
  %389 = vmatprep.subr.mxu0 0.0
  %390 = vmatpush1.msra.mxu0 0.0
  %391 = vmatprep.subr.mxu0 0.0
  %392 = vmatpush1.msra.mxu0 0.0
  %393 = vmatprep.subr.mxu0 0.0
  %394 = vmatpush1.msra.mxu0 0.0
  %395 = vmatprep.subr.mxu0 0.0
  %396 = vmatpush1.msra.mxu0 0.0
  %397 = vmatprep.subr.mxu0 0.0
  %398 = vmatpush1.msra.mxu0 0.0
  %399 = vmatprep.subr.mxu0 0.0
  %400 = vmatpush1.msra.mxu0 0.0
  %401 = vmatprep.subr.mxu0 0.0
  %402 = vmatpush1.msra.mxu0 0.0
  %403 = vmatprep.subr.mxu0 0.0
  %404 = vmatpush1.msra.mxu0 0.0
  %405 = vmatprep.subr.mxu0 0.0
  %406 = vmatpush1.msra.mxu0 0.0
  %407 = vmatprep.subr.mxu0 0.0
  %408 = vmatpush1.msra.mxu0 0.0
  %409 = vmatprep.subr.mxu0 0.0
  %410 = vmatpush1.msra.mxu0 0.0
  %411 = vmatprep.subr.mxu0 0.0
  %412 = vmatpush1.msra.mxu0 0.0
  %413 = vmatprep.subr.mxu0 0.0
  %414 = vmatpush1.msra.mxu0 0.0
  %415 = vmatprep.subr.mxu0 0.0
  %416 = vmatpush1.msra.mxu0 0.0
  %417 = vmatprep.subr.mxu0 0.0
  %418 = vmatpush1.msra.mxu0 0.0
  %419 = vmatprep.subr.mxu0 0.0
  %420 = vmatpush1.msra.mxu0 0.0
  %421 = vmatprep.subr.mxu0 0.0
  %422 = vmatpush1.msra.mxu0 0.0
  %423 = vmatprep.subr.mxu0 0.0
  %424 = vmatpush1.msra.mxu0 0.0
  %425 = vmatprep.subr.mxu0 0.0
  %426 = vmatpush1.msra.mxu0 0.0
  %427 = vmatprep.subr.mxu0 0.0
  %428 = vmatpush1.msra.mxu0 0.0
  %429 = vmatprep.subr.mxu0 0.0
  %430 = vmatpush1.msra.mxu0 0.0
  %431 = vmatprep.mubr.f32.mxu0 0.0
  %432 = vmatmul.mubr.f32.gmra.mrb[0].mxu0 %v365
  %v433 = vpop.f32.mrb[0].mxu0
  %v434 = vadd.f32 0.0, %v433
  %v435 = vpop.f32.mrb[0].mxu0
  %436 = vdwg.mxu0
  %v437 = vadd.f32 %v135, %v434
  %v438 = vxor.u32 %v437, 2147483648
  %v439 = vmul.f32 %v438, 1.442695
  %v440 = vpow.pop %v439
  %v441 = vadd.f32 %v440, 1.0
  %v442 = vrcp.pop %v441
  %v443 = vmul.f32 1.0, %v442
  %v444 = vtanh.pop %v437
  %v445 = vmul.f32 %v443, %v355
  %447 = vrot.lane.b32.xlu0 %v444, 64
  %v448 = vpop.permute.xlu0 %447
  %v450 = vmul.f32 %v443, %v448
  %452 = vrot.lane.b32.xlu0 %v450, 32
  %v453 = vpop.permute.xlu0 %452
  %v455 = vadd.f32 %v445, %v453
  %v456 = vtanh.pop %v455
  %458 = vrot.lane.b32.xlu0 %v456, 64
  %v459 = vpop.permute.xlu0 %458
  %v461 = vmul.f32 %v443, %v459
  %463 = vrot.lane.b32.xlu0 %v461, 32
  %v464 = vpop.permute.xlu0 %463
  %v465 = vsel %vm163, %v464, 0
  %467 = vmatprep.subr.mxu0 0.0
  %468 = vmatpush1.msra.mxu0 %v20
  %469 = vmatprep.subr.mxu0 0.0
  %470 = vmatpush1.msra.mxu0 %v21
  %471 = vmatprep.subr.mxu0 0.0
  %472 = vmatpush1.msra.mxu0 %v22
  %473 = vmatprep.subr.mxu0 0.0
  %474 = vmatpush1.msra.mxu0 %v23
  %475 = vmatprep.subr.mxu0 0.0
  %476 = vmatpush1.msra.mxu0 0.0
  %477 = vmatprep.subr.mxu0 0.0
  %478 = vmatpush1.msra.mxu0 0.0
  %479 = vmatprep.subr.mxu0 0.0
  %480 = vmatpush1.msra.mxu0 0.0
  %481 = vmatprep.subr.mxu0 0.0
  %482 = vmatpush1.msra.mxu0 0.0
  %483 = vmatprep.subr.mxu0 0.0
  %484 = vmatpush1.msra.mxu0 0.0
  %485 = vmatprep.subr.mxu0 0.0
  %486 = vmatpush1.msra.mxu0 0.0
  %487 = vmatprep.subr.mxu0 0.0
  %488 = vmatpush1.msra.mxu0 0.0
  %489 = vmatprep.subr.mxu0 0.0
  %490 = vmatpush1.msra.mxu0 0.0
  %491 = vmatprep.subr.mxu0 0.0
  %492 = vmatpush1.msra.mxu0 0.0
  %493 = vmatprep.subr.mxu0 0.0
  %494 = vmatpush1.msra.mxu0 0.0
  %495 = vmatprep.subr.mxu0 0.0
  %496 = vmatpush1.msra.mxu0 0.0
  %497 = vmatprep.subr.mxu0 0.0
  %498 = vmatpush1.msra.mxu0 0.0
  %499 = vmatprep.subr.mxu0 0.0
  %500 = vmatpush1.msra.mxu0 0.0
  %501 = vmatprep.subr.mxu0 0.0
  %502 = vmatpush1.msra.mxu0 0.0
  %503 = vmatprep.subr.mxu0 0.0
  %504 = vmatpush1.msra.mxu0 0.0
  %505 = vmatprep.subr.mxu0 0.0
  %506 = vmatpush1.msra.mxu0 0.0
  %507 = vmatprep.subr.mxu0 0.0
  %508 = vmatpush1.msra.mxu0 0.0
  %509 = vmatprep.subr.mxu0 0.0
  %510 = vmatpush1.msra.mxu0 0.0
  %511 = vmatprep.subr.mxu0 0.0
  %512 = vmatpush1.msra.mxu0 0.0
  %513 = vmatprep.subr.mxu0 0.0
  %514 = vmatpush1.msra.mxu0 0.0
  %515 = vmatprep.subr.mxu0 0.0
  %516 = vmatpush1.msra.mxu0 0.0
  %517 = vmatprep.subr.mxu0 0.0
  %518 = vmatpush1.msra.mxu0 0.0
  %519 = vmatprep.subr.mxu0 0.0
  %520 = vmatpush1.msra.mxu0 0.0
  %521 = vmatprep.subr.mxu0 0.0
  %522 = vmatpush1.msra.mxu0 0.0
  %523 = vmatprep.subr.mxu0 0.0
  %524 = vmatpush1.msra.mxu0 0.0
  %525 = vmatprep.subr.mxu0 0.0
  %526 = vmatpush1.msra.mxu0 0.0
  %527 = vmatprep.subr.mxu0 0.0
  %528 = vmatpush1.msra.mxu0 0.0
  %529 = vmatprep.subr.mxu0 0.0
  %530 = vmatpush1.msra.mxu0 0.0
  %531 = vmatprep.mubr.f32.mxu0 0.0
  %532 = vmatmul.mubr.f32.gmra.mrb[0].mxu0 %v465
  %v533 = vpop.f32.mrb[0].mxu0
  %v534 = vadd.f32 0.0, %v533
  %v535 = vpop.f32.mrb[0].mxu0
  %536 = vdwg.mxu0
  %v537 = vadd.f32 %v140, %v534
  %v538 = vxor.u32 %v537, 2147483648
  %v539 = vmul.f32 %v538, 1.442695
  %v540 = vpow.pop %v539
  %v541 = vadd.f32 %v540, 1.0
  %v542 = vrcp.pop %v541
  %v543 = vmul.f32 1.0, %v542
  %v544 = vtanh.pop %v537
  %v545 = vmul.f32 %v543, %v455
  %547 = vrot.lane.b32.xlu0 %v544, 64
  %v548 = vpop.permute.xlu0 %547
  %v550 = vmul.f32 %v543, %v548
  %552 = vrot.lane.b32.xlu0 %v550, 32
  %v553 = vpop.permute.xlu0 %552
  %v555 = vadd.f32 %v545, %v553
  %v556 = vtanh.pop %v555
  %558 = vrot.lane.b32.xlu0 %v556, 64
  %v559 = vpop.permute.xlu0 %558
  %v561 = vmul.f32 %v543, %v559
  %563 = vrot.lane.b32.xlu0 %v561, 32
  %v564 = vpop.permute.xlu0 %563
  %v565 = vsel %vm163, %v564, 0
  %567 = vmatprep.subr.mxu0 0.0
  %568 = vmatpush1.msra.mxu0 %v20
  %569 = vmatprep.subr.mxu0 0.0
  %570 = vmatpush1.msra.mxu0 %v21
  %571 = vmatprep.subr.mxu0 0.0
  %572 = vmatpush1.msra.mxu0 %v22
  %573 = vmatprep.subr.mxu0 0.0
  %574 = vmatpush1.msra.mxu0 %v23
  %575 = vmatprep.subr.mxu0 0.0
  %576 = vmatpush1.msra.mxu0 0.0
  %577 = vmatprep.subr.mxu0 0.0
  %578 = vmatpush1.msra.mxu0 0.0
  %579 = vmatprep.subr.mxu0 0.0
  %580 = vmatpush1.msra.mxu0 0.0
  %581 = vmatprep.subr.mxu0 0.0
  %582 = vmatpush1.msra.mxu0 0.0
  %583 = vmatprep.subr.mxu0 0.0
  %584 = vmatpush1.msra.mxu0 0.0
  %585 = vmatprep.subr.mxu0 0.0
  %586 = vmatpush1.msra.mxu0 0.0
  %587 = vmatprep.subr.mxu0 0.0
  %588 = vmatpush1.msra.mxu0 0.0
  %589 = vmatprep.subr.mxu0 0.0
  %590 = vmatpush1.msra.mxu0 0.0
  %591 = vmatprep.subr.mxu0 0.0
  %592 = vmatpush1.msra.mxu0 0.0
  %593 = vmatprep.subr.mxu0 0.0
  %594 = vmatpush1.msra.mxu0 0.0
  %595 = vmatprep.subr.mxu0 0.0
  %596 = vmatpush1.msra.mxu0 0.0
  %597 = vmatprep.subr.mxu0 0.0
  %598 = vmatpush1.msra.mxu0 0.0
  %599 = vmatprep.subr.mxu0 0.0
  %600 = vmatpush1.msra.mxu0 0.0
  %601 = vmatprep.subr.mxu0 0.0
  %602 = vmatpush1.msra.mxu0 0.0
  %603 = vmatprep.subr.mxu0 0.0
  %604 = vmatpush1.msra.mxu0 0.0
  %605 = vmatprep.subr.mxu0 0.0
  %606 = vmatpush1.msra.mxu0 0.0
  %607 = vmatprep.subr.mxu0 0.0
  %608 = vmatpush1.msra.mxu0 0.0
  %609 = vmatprep.subr.mxu0 0.0
  %610 = vmatpush1.msra.mxu0 0.0
  %611 = vmatprep.subr.mxu0 0.0
  %612 = vmatpush1.msra.mxu0 0.0
  %613 = vmatprep.subr.mxu0 0.0
  %614 = vmatpush1.msra.mxu0 0.0
  %615 = vmatprep.subr.mxu0 0.0
  %616 = vmatpush1.msra.mxu0 0.0
  %617 = vmatprep.subr.mxu0 0.0
  %618 = vmatpush1.msra.mxu0 0.0
  %619 = vmatprep.subr.mxu0 0.0
  %620 = vmatpush1.msra.mxu0 0.0
  %621 = vmatprep.subr.mxu0 0.0
  %622 = vmatpush1.msra.mxu0 0.0
  %623 = vmatprep.subr.mxu0 0.0
  %624 = vmatpush1.msra.mxu0 0.0
  %625 = vmatprep.subr.mxu0 0.0
  %626 = vmatpush1.msra.mxu0 0.0
  %627 = vmatprep.subr.mxu0 0.0
  %628 = vmatpush1.msra.mxu0 0.0
  %629 = vmatprep.subr.mxu0 0.0
  %630 = vmatpush1.msra.mxu0 0.0
  %631 = vmatprep.mubr.f32.mxu0 0.0
  %632 = vmatmul.mubr.f32.gmra.mrb[0].mxu0 %v565
  %v633 = vpop.f32.mrb[0].mxu0
  %v634 = vadd.f32 0.0, %v633
  %v635 = vpop.f32.mrb[0].mxu0
  %636 = vdwg.mxu0
  %v637 = vadd.f32 %v145, %v634
  %v638 = vxor.u32 %v637, 2147483648
  %v639 = vmul.f32 %v638, 1.442695
  %v640 = vpow.pop %v639
  %v641 = vadd.f32 %v640, 1.0
  %v642 = vrcp.pop %v641
  %v643 = vmul.f32 1.0, %v642
  %v644 = vtanh.pop %v637
  %v645 = vmul.f32 %v643, %v555
  %647 = vrot.lane.b32.xlu0 %v644, 64
  %v648 = vpop.permute.xlu0 %647
  %v650 = vmul.f32 %v643, %v648
  %652 = vrot.lane.b32.xlu0 %v650, 32
  %v653 = vpop.permute.xlu0 %652
  %v655 = vadd.f32 %v645, %v653
  %v656 = vtanh.pop %v655
  %658 = vrot.lane.b32.xlu0 %v656, 64
  %v659 = vpop.permute.xlu0 %658
  %v661 = vmul.f32 %v643, %v659
  %663 = vrot.lane.b32.xlu0 %v661, 32
  %v664 = vpop.permute.xlu0 %663
  %v665 = vsel %vm163, %v664, 0
  %667 = vmatprep.subr.mxu0 0.0
  %668 = vmatpush1.msra.mxu0 %v20
  %669 = vmatprep.subr.mxu0 0.0
  %670 = vmatpush1.msra.mxu0 %v21
  %671 = vmatprep.subr.mxu0 0.0
  %672 = vmatpush1.msra.mxu0 %v22
  %673 = vmatprep.subr.mxu0 0.0
  %674 = vmatpush1.msra.mxu0 %v23
  %675 = vmatprep.subr.mxu0 0.0
  %676 = vmatpush1.msra.mxu0 0.0
  %677 = vmatprep.subr.mxu0 0.0
  %678 = vmatpush1.msra.mxu0 0.0
  %679 = vmatprep.subr.mxu0 0.0
  %680 = vmatpush1.msra.mxu0 0.0
  %681 = vmatprep.subr.mxu0 0.0
  %682 = vmatpush1.msra.mxu0 0.0
  %683 = vmatprep.subr.mxu0 0.0
  %684 = vmatpush1.msra.mxu0 0.0
  %685 = vmatprep.subr.mxu0 0.0
  %686 = vmatpush1.msra.mxu0 0.0
  %687 = vmatprep.subr.mxu0 0.0
  %688 = vmatpush1.msra.mxu0 0.0
  %689 = vmatprep.subr.mxu0 0.0
  %690 = vmatpush1.msra.mxu0 0.0
  %691 = vmatprep.subr.mxu0 0.0
  %692 = vmatpush1.msra.mxu0 0.0
  %693 = vmatprep.subr.mxu0 0.0
  %694 = vmatpush1.msra.mxu0 0.0
  %695 = vmatprep.subr.mxu0 0.0
  %696 = vmatpush1.msra.mxu0 0.0
  %697 = vmatprep.subr.mxu0 0.0
  %698 = vmatpush1.msra.mxu0 0.0
  %699 = vmatprep.subr.mxu0 0.0
  %700 = vmatpush1.msra.mxu0 0.0
  %701 = vmatprep.subr.mxu0 0.0
  %702 = vmatpush1.msra.mxu0 0.0
  %703 = vmatprep.subr.mxu0 0.0
  %704 = vmatpush1.msra.mxu0 0.0
  %705 = vmatprep.subr.mxu0 0.0
  %706 = vmatpush1.msra.mxu0 0.0
  %707 = vmatprep.subr.mxu0 0.0
  %708 = vmatpush1.msra.mxu0 0.0
  %709 = vmatprep.subr.mxu0 0.0
  %710 = vmatpush1.msra.mxu0 0.0
  %711 = vmatprep.subr.mxu0 0.0
  %712 = vmatpush1.msra.mxu0 0.0
  %713 = vmatprep.subr.mxu0 0.0
  %714 = vmatpush1.msra.mxu0 0.0
  %715 = vmatprep.subr.mxu0 0.0
  %716 = vmatpush1.msra.mxu0 0.0
  %717 = vmatprep.subr.mxu0 0.0
  %718 = vmatpush1.msra.mxu0 0.0
  %719 = vmatprep.subr.mxu0 0.0
  %720 = vmatpush1.msra.mxu0 0.0
  %721 = vmatprep.subr.mxu0 0.0
  %722 = vmatpush1.msra.mxu0 0.0
  %723 = vmatprep.subr.mxu0 0.0
  %724 = vmatpush1.msra.mxu0 0.0
  %725 = vmatprep.subr.mxu0 0.0
  %726 = vmatpush1.msra.mxu0 0.0
  %727 = vmatprep.subr.mxu0 0.0
  %728 = vmatpush1.msra.mxu0 0.0
  %729 = vmatprep.subr.mxu0 0.0
  %730 = vmatpush1.msra.mxu0 0.0
  %731 = vmatprep.mubr.f32.mxu0 0.0
  %732 = vmatmul.mubr.f32.gmra.mrb[0].mxu0 %v665
  %v733 = vpop.f32.mrb[0].mxu0
  %v734 = vadd.f32 0.0, %v733
  %v735 = vpop.f32.mrb[0].mxu0
  %736 = vdwg.mxu0
  %v737 = vadd.f32 %v150, %v734
  %v738 = vxor.u32 %v737, 2147483648
  %v739 = vmul.f32 %v738, 1.442695
  %v740 = vpow.pop %v739
  %v741 = vadd.f32 %v740, 1.0
  %v742 = vrcp.pop %v741
  %v743 = vmul.f32 1.0, %v742
  %v744 = vtanh.pop %v737
  %v745 = vmul.f32 %v743, %v655
  %747 = vrot.lane.b32.xlu0 %v744, 64
  %v748 = vpop.permute.xlu0 %747
  %v750 = vmul.f32 %v743, %v748
  %752 = vrot.lane.b32.xlu0 %v750, 32
  %v753 = vpop.permute.xlu0 %752
  %v755 = vadd.f32 %v745, %v753
  %v756 = vtanh.pop %v755
  %758 = vrot.lane.b32.xlu0 %v756, 64
  %v759 = vpop.permute.xlu0 %758
  %v761 = vmul.f32 %v743, %v759
  %763 = vrot.lane.b32.xlu0 %v761, 32
  %v764 = vpop.permute.xlu0 %763
  %v765 = vsel %vm163, %v764, 0
  %767 = vmatprep.subr.mxu0 0.0
  %768 = vmatpush1.msra.mxu0 %v20
  %769 = vmatprep.subr.mxu0 0.0
  %770 = vmatpush1.msra.mxu0 %v21
  %771 = vmatprep.subr.mxu0 0.0
  %772 = vmatpush1.msra.mxu0 %v22
  %773 = vmatprep.subr.mxu0 0.0
  %774 = vmatpush1.msra.mxu0 %v23
  %775 = vmatprep.subr.mxu0 0.0
  %776 = vmatpush1.msra.mxu0 0.0
  %777 = vmatprep.subr.mxu0 0.0
  %778 = vmatpush1.msra.mxu0 0.0
  %779 = vmatprep.subr.mxu0 0.0
  %780 = vmatpush1.msra.mxu0 0.0
  %781 = vmatprep.subr.mxu0 0.0
  %782 = vmatpush1.msra.mxu0 0.0
  %783 = vmatprep.subr.mxu0 0.0
  %784 = vmatpush1.msra.mxu0 0.0
  %785 = vmatprep.subr.mxu0 0.0
  %786 = vmatpush1.msra.mxu0 0.0
  %787 = vmatprep.subr.mxu0 0.0
  %788 = vmatpush1.msra.mxu0 0.0
  %789 = vmatprep.subr.mxu0 0.0
  %790 = vmatpush1.msra.mxu0 0.0
  %791 = vmatprep.subr.mxu0 0.0
  %792 = vmatpush1.msra.mxu0 0.0
  %793 = vmatprep.subr.mxu0 0.0
  %794 = vmatpush1.msra.mxu0 0.0
  %795 = vmatprep.subr.mxu0 0.0
  %796 = vmatpush1.msra.mxu0 0.0
  %797 = vmatprep.subr.mxu0 0.0
  %798 = vmatpush1.msra.mxu0 0.0
  %799 = vmatprep.subr.mxu0 0.0
  %800 = vmatpush1.msra.mxu0 0.0
  %801 = vmatprep.subr.mxu0 0.0
  %802 = vmatpush1.msra.mxu0 0.0
  %803 = vmatprep.subr.mxu0 0.0
  %804 = vmatpush1.msra.mxu0 0.0
  %805 = vmatprep.subr.mxu0 0.0
  %806 = vmatpush1.msra.mxu0 0.0
  %807 = vmatprep.subr.mxu0 0.0
  %808 = vmatpush1.msra.mxu0 0.0
  %809 = vmatprep.subr.mxu0 0.0
  %810 = vmatpush1.msra.mxu0 0.0
  %811 = vmatprep.subr.mxu0 0.0
  %812 = vmatpush1.msra.mxu0 0.0
  %813 = vmatprep.subr.mxu0 0.0
  %814 = vmatpush1.msra.mxu0 0.0
  %815 = vmatprep.subr.mxu0 0.0
  %816 = vmatpush1.msra.mxu0 0.0
  %817 = vmatprep.subr.mxu0 0.0
  %818 = vmatpush1.msra.mxu0 0.0
  %819 = vmatprep.subr.mxu0 0.0
  %820 = vmatpush1.msra.mxu0 0.0
  %821 = vmatprep.subr.mxu0 0.0
  %822 = vmatpush1.msra.mxu0 0.0
  %823 = vmatprep.subr.mxu0 0.0
  %824 = vmatpush1.msra.mxu0 0.0
  %825 = vmatprep.subr.mxu0 0.0
  %826 = vmatpush1.msra.mxu0 0.0
  %827 = vmatprep.subr.mxu0 0.0
  %828 = vmatpush1.msra.mxu0 0.0
  %829 = vmatprep.subr.mxu0 0.0
  %830 = vmatpush1.msra.mxu0 0.0
  %831 = vmatprep.mubr.f32.mxu0 0.0
  %832 = vmatmul.mubr.f32.gmra.mrb[0].mxu0 %v765
  %v833 = vpop.f32.mrb[0].mxu0
  %v834 = vadd.f32 0.0, %v833
  %v835 = vpop.f32.mrb[0].mxu0
  %836 = vdwg.mxu0
  %v837 = vadd.f32 %v155, %v834
  %v838 = vxor.u32 %v837, 2147483648
  %v839 = vmul.f32 %v838, 1.442695
  %v840 = vpow.pop %v839
  %v841 = vadd.f32 %v840, 1.0
  %v842 = vrcp.pop %v841
  %v843 = vmul.f32 1.0, %v842
  %v844 = vtanh.pop %v837
  %v845 = vmul.f32 %v843, %v755
  %847 = vrot.lane.b32.xlu0 %v844, 64
  %v848 = vpop.permute.xlu0 %847
  %v850 = vmul.f32 %v843, %v848
  %852 = vrot.lane.b32.xlu0 %v850, 32
  %v853 = vpop.permute.xlu0 %852
  %v855 = vadd.f32 %v845, %v853
  %v856 = vtanh.pop %v855
  %858 = vrot.lane.b32.xlu0 %v856, 64
  %v859 = vpop.permute.xlu0 %858
  %v861 = vmul.f32 %v843, %v859
  %863 = vrot.lane.b32.xlu0 %v861, 32
  %v864 = vpop.permute.xlu0 %863
  %v865 = vsel %vm163, %v864, 0
  %867 = vmatprep.subr.mxu0 0.0
  %868 = vmatpush1.msra.mxu0 %v20
  %869 = vmatprep.subr.mxu0 0.0
  %870 = vmatpush1.msra.mxu0 %v21
  %871 = vmatprep.subr.mxu0 0.0
  %872 = vmatpush1.msra.mxu0 %v22
  %873 = vmatprep.subr.mxu0 0.0
  %874 = vmatpush1.msra.mxu0 %v23
  %875 = vmatprep.subr.mxu0 0.0
  %876 = vmatpush1.msra.mxu0 0.0
  %877 = vmatprep.subr.mxu0 0.0
  %878 = vmatpush1.msra.mxu0 0.0
  %879 = vmatprep.subr.mxu0 0.0
  %880 = vmatpush1.msra.mxu0 0.0
  %881 = vmatprep.subr.mxu0 0.0
  %882 = vmatpush1.msra.mxu0 0.0
  %883 = vmatprep.subr.mxu0 0.0
  %884 = vmatpush1.msra.mxu0 0.0
  %885 = vmatprep.subr.mxu0 0.0
  %886 = vmatpush1.msra.mxu0 0.0
  %887 = vmatprep.subr.mxu0 0.0
  %888 = vmatpush1.msra.mxu0 0.0
  %889 = vmatprep.subr.mxu0 0.0
  %890 = vmatpush1.msra.mxu0 0.0
  %891 = vmatprep.subr.mxu0 0.0
  %892 = vmatpush1.msra.mxu0 0.0
  %893 = vmatprep.subr.mxu0 0.0
  %894 = vmatpush1.msra.mxu0 0.0
  %895 = vmatprep.subr.mxu0 0.0
  %896 = vmatpush1.msra.mxu0 0.0
  %897 = vmatprep.subr.mxu0 0.0
  %898 = vmatpush1.msra.mxu0 0.0
  %899 = vmatprep.subr.mxu0 0.0
  %900 = vmatpush1.msra.mxu0 0.0
  %901 = vmatprep.subr.mxu0 0.0
  %902 = vmatpush1.msra.mxu0 0.0
  %903 = vmatprep.subr.mxu0 0.0
  %904 = vmatpush1.msra.mxu0 0.0
  %905 = vmatprep.subr.mxu0 0.0
  %906 = vmatpush1.msra.mxu0 0.0
  %907 = vmatprep.subr.mxu0 0.0
  %908 = vmatpush1.msra.mxu0 0.0
  %909 = vmatprep.subr.mxu0 0.0
  %910 = vmatpush1.msra.mxu0 0.0
  %911 = vmatprep.subr.mxu0 0.0
  %912 = vmatpush1.msra.mxu0 0.0
  %913 = vmatprep.subr.mxu0 0.0
  %914 = vmatpush1.msra.mxu0 0.0
  %915 = vmatprep.subr.mxu0 0.0
  %916 = vmatpush1.msra.mxu0 0.0
  %917 = vmatprep.subr.mxu0 0.0
  %918 = vmatpush1.msra.mxu0 0.0
  %919 = vmatprep.subr.mxu0 0.0
  %920 = vmatpush1.msra.mxu0 0.0
  %921 = vmatprep.subr.mxu0 0.0
  %922 = vmatpush1.msra.mxu0 0.0
  %923 = vmatprep.subr.mxu0 0.0
  %924 = vmatpush1.msra.mxu0 0.0
  %925 = vmatprep.subr.mxu0 0.0
  %926 = vmatpush1.msra.mxu0 0.0
  %927 = vmatprep.subr.mxu0 0.0
  %928 = vmatpush1.msra.mxu0 0.0
  %929 = vmatprep.subr.mxu0 0.0
  %930 = vmatpush1.msra.mxu0 0.0
  %931 = vmatprep.mubr.f32.mxu0 0.0
  %932 = vmatmul.mubr.f32.gmra.mrb[0].mxu0 %v865
  %v933 = vpop.f32.mrb[0].mxu0
  %v934 = vadd.f32 0.0, %v933
  %v935 = vpop.f32.mrb[0].mxu0
  %936 = vdwg.mxu0
  %v937 = vadd.f32 %v160, %v934
  %v938 = vxor.u32 %v937, 2147483648
  %v939 = vmul.f32 %v938, 1.442695
  %v940 = vpow.pop %v939
  %v941 = vadd.f32 %v940, 1.0
  %v942 = vrcp.pop %v941
  %v943 = vmul.f32 1.0, %v942
  %v944 = vtanh.pop %v937
  %v945 = vmul.f32 %v943, %v855
  %947 = vrot.lane.b32.xlu0 %v944, 64
  %v948 = vpop.permute.xlu0 %947
  %v950 = vmul.f32 %v943, %v948
  %952 = vrot.lane.b32.xlu0 %v950, 32
  %v953 = vpop.permute.xlu0 %952
  %v955 = vadd.f32 %v945, %v953
  %v956 = vtanh.pop %v955
  %958 = vrot.lane.b32.xlu0 %v956, 64
  %v959 = vpop.permute.xlu0 %958
  %v961 = vmul.f32 %v943, %v959
  %v962 = vld [vmem:[%s1 + $0x30] sm:$0xff]
  %v963 = vld [vmem:[%s1 + $0x38] sm:$0x1]
  %964 = vrot.lane.b32.xlu0 %v11, 4
  %v965 = vpop.permute.xlu0 %964
  %966 = vrot.lane.b32.xlu0 %v12, 4
  %v967 = vpop.permute.xlu0 %966
  %968 = vrot.lane.b32.xlu0 %v13, 4
  %v969 = vpop.permute.xlu0 %968
  %970 = vrot.lane.b32.xlu0 %v14, 4
  %v971 = vpop.permute.xlu0 %970
  %972 = vrot.lane.b32.xlu0 %v15, 4
  %v973 = vpop.permute.xlu0 %972
  %974 = vrot.lane.b32.xlu0 %v16, 4
  %v975 = vpop.permute.xlu0 %974
  %976 = vrot.lane.b32.xlu0 %v17, 4
  %v977 = vpop.permute.xlu0 %976
  %978 = vrot.lane.b32.xlu0 %v18, 4
  %v979 = vpop.permute.xlu0 %978
  %v988 = vsel %vm29, 0.0, %v965
  %v989 = vsel %vm29, %v11, %v967
  %v990 = vsel %vm29, %v12, %v969
  %v991 = vsel %vm29, %v13, %v971
  %v992 = vsel %vm29, %v14, %v973
  %v993 = vsel %vm29, %v15, %v975
  %v994 = vsel %vm29, %v16, %v977
  %v995 = vsel %vm29, %v17, %v979
  %v996 = vlaneseq
  %v997 = vshrl.u32 %v996, 7
  %v998 = vsub.s32 0, %v997
  %v999 = vrot.slane %v963, %v998
  %vm1000 = vcmask 64512
  %v1002 = vsel %vm1000, %v988, 0
  %v1005 = vsel %vm1000, %v989, 0
  %v1008 = vsel %vm1000, %v990, 0
  %v1011 = vsel %vm1000, %v991, 0
  %v1014 = vsel %vm1000, %v992, 0
  %v1017 = vsel %vm1000, %v993, 0
  %v1020 = vsel %vm1000, %v994, 0
  %v1023 = vsel %vm1000, %v995, 0
  %1025 = vmatprep.subr.mxu0 0.0
  %1026 = vmatpush1.msra.mxu0 %v962
  %1027 = vmatprep.subr.mxu0 0.0
  %1028 = vmatpush1.msra.mxu0 0.0
  %1029 = vmatprep.subr.mxu0 0.0
  %1030 = vmatpush1.msra.mxu0 0.0
  %1031 = vmatprep.subr.mxu0 0.0
  %1032 = vmatpush1.msra.mxu0 0.0
  %1033 = vmatprep.subr.mxu0 0.0
  %1034 = vmatpush1.msra.mxu0 0.0
  %1035 = vmatprep.subr.mxu0 0.0
  %1036 = vmatpush1.msra.mxu0 0.0
  %1037 = vmatprep.subr.mxu0 0.0
  %1038 = vmatpush1.msra.mxu0 0.0
  %1039 = vmatprep.subr.mxu0 0.0
  %1040 = vmatpush1.msra.mxu0 0.0
  %1041 = vmatprep.subr.mxu0 0.0
  %1042 = vmatpush1.msra.mxu0 0.0
  %1043 = vmatprep.subr.mxu0 0.0
  %1044 = vmatpush1.msra.mxu0 0.0
  %1045 = vmatprep.subr.mxu0 0.0
  %1046 = vmatpush1.msra.mxu0 0.0
  %1047 = vmatprep.subr.mxu0 0.0
  %1048 = vmatpush1.msra.mxu0 0.0
  %1049 = vmatprep.subr.mxu0 0.0
  %1050 = vmatpush1.msra.mxu0 0.0
  %1051 = vmatprep.subr.mxu0 0.0
  %1052 = vmatpush1.msra.mxu0 0.0
  %1053 = vmatprep.subr.mxu0 0.0
  %1054 = vmatpush1.msra.mxu0 0.0
  %1055 = vmatprep.subr.mxu0 0.0
  %1056 = vmatpush1.msra.mxu0 0.0
  %1057 = vmatprep.subr.mxu0 0.0
  %1058 = vmatpush1.msra.mxu0 0.0
  %1059 = vmatprep.subr.mxu0 0.0
  %1060 = vmatpush1.msra.mxu0 0.0
  %1061 = vmatprep.subr.mxu0 0.0
  %1062 = vmatpush1.msra.mxu0 0.0
  %1063 = vmatprep.subr.mxu0 0.0
  %1064 = vmatpush1.msra.mxu0 0.0
  %1065 = vmatprep.subr.mxu0 0.0
  %1066 = vmatpush1.msra.mxu0 0.0
  %1067 = vmatprep.subr.mxu0 0.0
  %1068 = vmatpush1.msra.mxu0 0.0
  %1069 = vmatprep.subr.mxu0 0.0
  %1070 = vmatpush1.msra.mxu0 0.0
  %1071 = vmatprep.subr.mxu0 0.0
  %1072 = vmatpush1.msra.mxu0 0.0
  %1073 = vmatprep.subr.mxu0 0.0
  %1074 = vmatpush1.msra.mxu0 0.0
  %1075 = vmatprep.subr.mxu0 0.0
  %1076 = vmatpush1.msra.mxu0 0.0
  %1077 = vmatprep.subr.mxu0 0.0
  %1078 = vmatpush1.msra.mxu0 0.0
  %1079 = vmatprep.subr.mxu0 0.0
  %1080 = vmatpush1.msra.mxu0 0.0
  %1081 = vmatprep.subr.mxu0 0.0
  %1082 = vmatpush1.msra.mxu0 0.0
  %1083 = vmatprep.subr.mxu0 0.0
  %1084 = vmatpush1.msra.mxu0 0.0
  %1085 = vmatprep.subr.mxu0 0.0
  %1086 = vmatpush1.msra.mxu0 0.0
  %1087 = vmatprep.subr.mxu0 0.0
  %1088 = vmatpush1.msra.mxu0 0.0
  %1089 = vmatprep.mubr.f32.mxu0 0.0
  %1090 = vmatmul.mubr.f32.gmra.mrb[0].mxu0 %v1002
  %v1091 = vpop.f32.mrb[0].mxu0
  %v1092 = vadd.f32 %v999, %v1091
  %v1093 = vpop.f32.mrb[0].mxu0
  %1094 = vmatprep.mubr.f32.mxu0 0.0
  %1095 = vmatmul.mubr.f32.gmra.mrb[0].mxu0 %v1005
  %v1096 = vpop.f32.mrb[0].mxu0
  %v1097 = vadd.f32 %v999, %v1096
  %v1098 = vpop.f32.mrb[0].mxu0
  %1099 = vmatprep.mubr.f32.mxu0 0.0
  %1100 = vmatmul.mubr.f32.gmra.mrb[0].mxu0 %v1008
  %v1101 = vpop.f32.mrb[0].mxu0
  %v1102 = vadd.f32 %v999, %v1101
  %v1103 = vpop.f32.mrb[0].mxu0
  %1104 = vmatprep.mubr.f32.mxu0 0.0
  %1105 = vmatmul.mubr.f32.gmra.mrb[0].mxu0 %v1011
  %v1106 = vpop.f32.mrb[0].mxu0
  %v1107 = vadd.f32 %v999, %v1106
  %v1108 = vpop.f32.mrb[0].mxu0
  %1109 = vmatprep.mubr.f32.mxu0 0.0
  %1110 = vmatmul.mubr.f32.gmra.mrb[0].mxu0 %v1014
  %v1111 = vpop.f32.mrb[0].mxu0
  %v1112 = vadd.f32 %v999, %v1111
  %v1113 = vpop.f32.mrb[0].mxu0
  %1114 = vmatprep.mubr.f32.mxu0 0.0
  %1115 = vmatmul.mubr.f32.gmra.mrb[0].mxu0 %v1017
  %v1116 = vpop.f32.mrb[0].mxu0
  %v1117 = vadd.f32 %v999, %v1116
  %v1118 = vpop.f32.mrb[0].mxu0
  %1119 = vmatprep.mubr.f32.mxu0 0.0
  %1120 = vmatmul.mubr.f32.gmra.mrb[0].mxu0 %v1020
  %v1121 = vpop.f32.mrb[0].mxu0
  %v1122 = vadd.f32 %v999, %v1121
  %v1123 = vpop.f32.mrb[0].mxu0
  %1124 = vmatprep.mubr.f32.mxu0 0.0
  %1125 = vmatmul.mubr.f32.gmra.mrb[0].mxu0 %v1023
  %v1126 = vpop.f32.mrb[0].mxu0
  %v1127 = vadd.f32 %v999, %v1126
  %v1128 = vpop.f32.mrb[0].mxu0
  %1129 = vdwg.mxu0
  %v1130 = vmax.f32 %v1092, 0.0
  %v1131 = vmax.f32 %v1097, 0.0
  %v1132 = vmax.f32 %v1102, 0.0
  %v1133 = vmax.f32 %v1107, 0.0
  %v1134 = vmax.f32 %v1112, 0.0
  %v1135 = vmax.f32 %v1117, 0.0
  %v1136 = vmax.f32 %v1122, 0.0
  %v1137 = vmax.f32 %v1127, 0.0
  %v1138 = vld [vmem:[%s1 + $0x40] sm:$0xff]
  %v1139 = vld [vmem:[%s1 + $0x48] sm:$0xff]
  %v1140 = vld [vmem:[%s1 + $0x50] sm:$0xff]
  %v1141 = vld [vmem:[%s1 + $0x58] sm:$0xff]
  %v1142 = vld [vmem:[%s1 + $0x60] sm:$0x1]
  %1151 = vrot.lane.b32.xlu0 %v1130, 16
  %v1152 = vpop.permute.xlu0 %1151
  %1153 = vrot.lane.b32.xlu0 %v1131, 16
  %v1154 = vpop.permute.xlu0 %1153
  %1155 = vrot.lane.b32.xlu0 %v1132, 16
  %v1156 = vpop.permute.xlu0 %1155
  %1157 = vrot.lane.b32.xlu0 %v1133, 16
  %v1158 = vpop.permute.xlu0 %1157
  %1159 = vrot.lane.b32.xlu0 %v1134, 16
  %v1160 = vpop.permute.xlu0 %1159
  %1161 = vrot.lane.b32.xlu0 %v1135, 16
  %v1162 = vpop.permute.xlu0 %1161
  %1163 = vrot.lane.b32.xlu0 %v1136, 16
  %v1164 = vpop.permute.xlu0 %1163
  %1165 = vrot.lane.b32.xlu0 %v1137, 16
  %v1166 = vpop.permute.xlu0 %1165
  %vm1175 = vcmask 130048
  %v1176 = vsel %vm1175, 0.0, %v1152
  %v1177 = vsel %vm1175, %v1130, %v1154
  %v1178 = vsel %vm1175, %v1131, %v1156
  %v1179 = vsel %vm1175, %v1132, %v1158
  %v1180 = vsel %vm1175, %v1133, %v1160
  %v1181 = vsel %vm1175, %v1134, %v1162
  %v1182 = vsel %vm1175, %v1135, %v1164
  %v1183 = vsel %vm1175, %v1136, %v1166
  %v1184 = vlaneseq
  %v1185 = vshrl.u32 %v1184, 7
  %v1186 = vsub.s32 0, %v1185
  %v1187 = vrot.slane %v1142, %v1186
  %v1189 = vsel %vm163, %v1176, 0
  %v1192 = vsel %vm163, %v1177, 0
  %v1195 = vsel %vm163, %v1178, 0
  %v1198 = vsel %vm163, %v1179, 0
  %v1201 = vsel %vm163, %v1180, 0
  %v1204 = vsel %vm163, %v1181, 0
  %v1207 = vsel %vm163, %v1182, 0
  %v1210 = vsel %vm163, %v1183, 0
  %1212 = vmatprep.subr.mxu0 0.0
  %1213 = vmatpush1.msra.mxu0 %v1138
  %1214 = vmatprep.subr.mxu0 0.0
  %1215 = vmatpush1.msra.mxu0 %v1139
  %1216 = vmatprep.subr.mxu0 0.0
  %1217 = vmatpush1.msra.mxu0 %v1140
  %1218 = vmatprep.subr.mxu0 0.0
  %1219 = vmatpush1.msra.mxu0 %v1141
  %1220 = vmatprep.subr.mxu0 0.0
  %1221 = vmatpush1.msra.mxu0 0.0
  %1222 = vmatprep.subr.mxu0 0.0
  %1223 = vmatpush1.msra.mxu0 0.0
  %1224 = vmatprep.subr.mxu0 0.0
  %1225 = vmatpush1.msra.mxu0 0.0
  %1226 = vmatprep.subr.mxu0 0.0
  %1227 = vmatpush1.msra.mxu0 0.0
  %1228 = vmatprep.subr.mxu0 0.0
  %1229 = vmatpush1.msra.mxu0 0.0
  %1230 = vmatprep.subr.mxu0 0.0
  %1231 = vmatpush1.msra.mxu0 0.0
  %1232 = vmatprep.subr.mxu0 0.0
  %1233 = vmatpush1.msra.mxu0 0.0
  %1234 = vmatprep.subr.mxu0 0.0
  %1235 = vmatpush1.msra.mxu0 0.0
  %1236 = vmatprep.subr.mxu0 0.0
  %1237 = vmatpush1.msra.mxu0 0.0
  %1238 = vmatprep.subr.mxu0 0.0
  %1239 = vmatpush1.msra.mxu0 0.0
  %1240 = vmatprep.subr.mxu0 0.0
  %1241 = vmatpush1.msra.mxu0 0.0
  %1242 = vmatprep.subr.mxu0 0.0
  %1243 = vmatpush1.msra.mxu0 0.0
  %1244 = vmatprep.subr.mxu0 0.0
  %1245 = vmatpush1.msra.mxu0 0.0
  %1246 = vmatprep.subr.mxu0 0.0
  %1247 = vmatpush1.msra.mxu0 0.0
  %1248 = vmatprep.subr.mxu0 0.0
  %1249 = vmatpush1.msra.mxu0 0.0
  %1250 = vmatprep.subr.mxu0 0.0
  %1251 = vmatpush1.msra.mxu0 0.0
  %1252 = vmatprep.subr.mxu0 0.0
  %1253 = vmatpush1.msra.mxu0 0.0
  %1254 = vmatprep.subr.mxu0 0.0
  %1255 = vmatpush1.msra.mxu0 0.0
  %1256 = vmatprep.subr.mxu0 0.0
  %1257 = vmatpush1.msra.mxu0 0.0
  %1258 = vmatprep.subr.mxu0 0.0
  %1259 = vmatpush1.msra.mxu0 0.0
  %1260 = vmatprep.subr.mxu0 0.0
  %1261 = vmatpush1.msra.mxu0 0.0
  %1262 = vmatprep.subr.mxu0 0.0
  %1263 = vmatpush1.msra.mxu0 0.0
  %1264 = vmatprep.subr.mxu0 0.0
  %1265 = vmatpush1.msra.mxu0 0.0
  %1266 = vmatprep.subr.mxu0 0.0
  %1267 = vmatpush1.msra.mxu0 0.0
  %1268 = vmatprep.subr.mxu0 0.0
  %1269 = vmatpush1.msra.mxu0 0.0
  %1270 = vmatprep.subr.mxu0 0.0
  %1271 = vmatpush1.msra.mxu0 0.0
  %1272 = vmatprep.subr.mxu0 0.0
  %1273 = vmatpush1.msra.mxu0 0.0
  %1274 = vmatprep.subr.mxu0 0.0
  %1275 = vmatpush1.msra.mxu0 0.0
  %1276 = vmatprep.mubr.f32.mxu0 0.0
  %1277 = vmatmul.mubr.f32.gmra.mrb[0].mxu0 %v1189
  %v1278 = vpop.f32.mrb[0].mxu0
  %v1279 = vadd.f32 %v1187, %v1278
  %v1280 = vpop.f32.mrb[0].mxu0
  %1281 = vmatprep.mubr.f32.mxu0 0.0
  %1282 = vmatmul.mubr.f32.gmra.mrb[0].mxu0 %v1192
  %v1283 = vpop.f32.mrb[0].mxu0
  %v1284 = vadd.f32 %v1187, %v1283
  %v1285 = vpop.f32.mrb[0].mxu0
  %1286 = vmatprep.mubr.f32.mxu0 0.0
  %1287 = vmatmul.mubr.f32.gmra.mrb[0].mxu0 %v1195
  %v1288 = vpop.f32.mrb[0].mxu0
  %v1289 = vadd.f32 %v1187, %v1288
  %v1290 = vpop.f32.mrb[0].mxu0
  %1291 = vmatprep.mubr.f32.mxu0 0.0
  %1292 = vmatmul.mubr.f32.gmra.mrb[0].mxu0 %v1198
  %v1293 = vpop.f32.mrb[0].mxu0
  %v1294 = vadd.f32 %v1187, %v1293
  %v1295 = vpop.f32.mrb[0].mxu0
  %1296 = vmatprep.mubr.f32.mxu0 0.0
  %1297 = vmatmul.mubr.f32.gmra.mrb[0].mxu0 %v1201
  %v1298 = vpop.f32.mrb[0].mxu0
  %v1299 = vadd.f32 %v1187, %v1298
  %v1300 = vpop.f32.mrb[0].mxu0
  %1301 = vmatprep.mubr.f32.mxu0 0.0
  %1302 = vmatmul.mubr.f32.gmra.mrb[0].mxu0 %v1204
  %v1303 = vpop.f32.mrb[0].mxu0
  %v1304 = vadd.f32 %v1187, %v1303
  %v1305 = vpop.f32.mrb[0].mxu0
  %1306 = vmatprep.mubr.f32.mxu0 0.0
  %1307 = vmatmul.mubr.f32.gmra.mrb[0].mxu0 %v1207
  %v1308 = vpop.f32.mrb[0].mxu0
  %v1309 = vadd.f32 %v1187, %v1308
  %v1310 = vpop.f32.mrb[0].mxu0
  %1311 = vmatprep.mubr.f32.mxu0 0.0
  %1312 = vmatmul.mubr.f32.gmra.mrb[0].mxu0 %v1210
  %v1313 = vpop.f32.mrb[0].mxu0
  %v1314 = vadd.f32 %v1187, %v1313
  %v1315 = vpop.f32.mrb[0].mxu0
  %1316 = vdwg.mxu0
  %v1317 = vmax.f32 %v1279, 0.0
  %v1318 = vmax.f32 %v1284, 0.0
  %v1319 = vmax.f32 %v1289, 0.0
  %v1320 = vmax.f32 %v1294, 0.0
  %v1321 = vmax.f32 %v1299, 0.0
  %v1322 = vmax.f32 %v1304, 0.0
  %v1323 = vmax.f32 %v1309, 0.0
  %v1324 = vmax.f32 %v1314, 0.0
  %v1325 = vld [vmem:[%s1 + $0x68] sm:$0xf]
  %v1326 = vld [vmem:[%s1 + $0x70] sm:$0x1]
  %v1327 = vlaneseq
  %v1328 = vshrl.u32 %v1327, 7
  %v1329 = vsub.s32 0, %v1328
  %v1330 = vrot.slane %v1326, %v1329
  %v1332 = vsel %vm54, %v1325, 0
  %1334 = vmatprep.subr.mxu0 0.0
  %1335 = vmatpush1.msra.mxu0 %v1332
  %1336 = vmatprep.subr.mxu0 0.0
  %1337 = vmatpush1.msra.mxu0 0.0
  %1338 = vmatprep.subr.mxu0 0.0
  %1339 = vmatpush1.msra.mxu0 0.0
  %1340 = vmatprep.subr.mxu0 0.0
  %1341 = vmatpush1.msra.mxu0 0.0
  %1342 = vmatprep.subr.mxu0 0.0
  %1343 = vmatpush1.msra.mxu0 0.0
  %1344 = vmatprep.subr.mxu0 0.0
  %1345 = vmatpush1.msra.mxu0 0.0
  %1346 = vmatprep.subr.mxu0 0.0
  %1347 = vmatpush1.msra.mxu0 0.0
  %1348 = vmatprep.subr.mxu0 0.0
  %1349 = vmatpush1.msra.mxu0 0.0
  %1350 = vmatprep.subr.mxu0 0.0
  %1351 = vmatpush1.msra.mxu0 0.0
  %1352 = vmatprep.subr.mxu0 0.0
  %1353 = vmatpush1.msra.mxu0 0.0
  %1354 = vmatprep.subr.mxu0 0.0
  %1355 = vmatpush1.msra.mxu0 0.0
  %1356 = vmatprep.subr.mxu0 0.0
  %1357 = vmatpush1.msra.mxu0 0.0
  %1358 = vmatprep.subr.mxu0 0.0
  %1359 = vmatpush1.msra.mxu0 0.0
  %1360 = vmatprep.subr.mxu0 0.0
  %1361 = vmatpush1.msra.mxu0 0.0
  %1362 = vmatprep.subr.mxu0 0.0
  %1363 = vmatpush1.msra.mxu0 0.0
  %1364 = vmatprep.subr.mxu0 0.0
  %1365 = vmatpush1.msra.mxu0 0.0
  %1366 = vmatprep.subr.mxu0 0.0
  %1367 = vmatpush1.msra.mxu0 0.0
  %1368 = vmatprep.subr.mxu0 0.0
  %1369 = vmatpush1.msra.mxu0 0.0
  %1370 = vmatprep.subr.mxu0 0.0
  %1371 = vmatpush1.msra.mxu0 0.0
  %1372 = vmatprep.subr.mxu0 0.0
  %1373 = vmatpush1.msra.mxu0 0.0
  %1374 = vmatprep.subr.mxu0 0.0
  %1375 = vmatpush1.msra.mxu0 0.0
  %1376 = vmatprep.subr.mxu0 0.0
  %1377 = vmatpush1.msra.mxu0 0.0
  %1378 = vmatprep.subr.mxu0 0.0
  %1379 = vmatpush1.msra.mxu0 0.0
  %1380 = vmatprep.subr.mxu0 0.0
  %1381 = vmatpush1.msra.mxu0 0.0
  %1382 = vmatprep.subr.mxu0 0.0
  %1383 = vmatpush1.msra.mxu0 0.0
  %1384 = vmatprep.subr.mxu0 0.0
  %1385 = vmatpush1.msra.mxu0 0.0
  %1386 = vmatprep.subr.mxu0 0.0
  %1387 = vmatpush1.msra.mxu0 0.0
  %1388 = vmatprep.subr.mxu0 0.0
  %1389 = vmatpush1.msra.mxu0 0.0
  %1390 = vmatprep.subr.mxu0 0.0
  %1391 = vmatpush1.msra.mxu0 0.0
  %1392 = vmatprep.subr.mxu0 0.0
  %1393 = vmatpush1.msra.mxu0 0.0
  %1394 = vmatprep.subr.mxu0 0.0
  %1395 = vmatpush1.msra.mxu0 0.0
  %1396 = vmatprep.subr.mxu0 0.0
  %1397 = vmatpush1.msra.mxu0 0.0
  %1398 = vmatprep.mubr.f32.mxu0 0.0
  %1399 = vmatmul.mubr.f32.gmra.mrb[0].mxu0 %v31
  %v1400 = vpop.f32.mrb[0].mxu0
  %v1401 = vadd.f32 %v1330, %v1400
  %v1402 = vpop.f32.mrb[0].mxu0
  %1403 = vmatprep.mubr.f32.mxu0 0.0
  %1404 = vmatmul.mubr.f32.gmra.mrb[0].mxu0 %v34
  %v1405 = vpop.f32.mrb[0].mxu0
  %v1406 = vadd.f32 %v1330, %v1405
  %v1407 = vpop.f32.mrb[0].mxu0
  %1408 = vmatprep.mubr.f32.mxu0 0.0
  %1409 = vmatmul.mubr.f32.gmra.mrb[0].mxu0 %v37
  %v1410 = vpop.f32.mrb[0].mxu0
  %v1411 = vadd.f32 %v1330, %v1410
  %v1412 = vpop.f32.mrb[0].mxu0
  %1413 = vmatprep.mubr.f32.mxu0 0.0
  %1414 = vmatmul.mubr.f32.gmra.mrb[0].mxu0 %v40
  %v1415 = vpop.f32.mrb[0].mxu0
  %v1416 = vadd.f32 %v1330, %v1415
  %v1417 = vpop.f32.mrb[0].mxu0
  %1418 = vmatprep.mubr.f32.mxu0 0.0
  %1419 = vmatmul.mubr.f32.gmra.mrb[0].mxu0 %v43
  %v1420 = vpop.f32.mrb[0].mxu0
  %v1421 = vadd.f32 %v1330, %v1420
  %v1422 = vpop.f32.mrb[0].mxu0
  %1423 = vmatprep.mubr.f32.mxu0 0.0
  %1424 = vmatmul.mubr.f32.gmra.mrb[0].mxu0 %v46
  %v1425 = vpop.f32.mrb[0].mxu0
  %v1426 = vadd.f32 %v1330, %v1425
  %v1427 = vpop.f32.mrb[0].mxu0
  %1428 = vmatprep.mubr.f32.mxu0 0.0
  %1429 = vmatmul.mubr.f32.gmra.mrb[0].mxu0 %v49
  %v1430 = vpop.f32.mrb[0].mxu0
  %v1431 = vadd.f32 %v1330, %v1430
  %v1432 = vpop.f32.mrb[0].mxu0
  %1433 = vmatprep.mubr.f32.mxu0 0.0
  %1434 = vmatmul.mubr.f32.gmra.mrb[0].mxu0 %v52
  %v1435 = vpop.f32.mrb[0].mxu0
  %v1436 = vadd.f32 %v1330, %v1435
  %v1437 = vpop.f32.mrb[0].mxu0
  %1438 = vdwg.mxu0
  %v1439 = vadd.f32 %v1317, %v1401
  %v1440 = vadd.f32 %v1318, %v1406
  %v1441 = vadd.f32 %v1319, %v1411
  %v1442 = vadd.f32 %v1320, %v1416
  %v1443 = vadd.f32 %v1321, %v1421
  %v1444 = vadd.f32 %v1322, %v1426
  %v1445 = vadd.f32 %v1323, %v1431
  %v1446 = vadd.f32 %v1324, %v1436
  %v1447 = vmax.f32 %v1439, 0.0
  %v1448 = vmax.f32 %v1440, 0.0
  %v1449 = vmax.f32 %v1441, 0.0
  %v1450 = vmax.f32 %v1442, 0.0
  %v1451 = vmax.f32 %v1443, 0.0
  %v1452 = vmax.f32 %v1444, 0.0
  %v1453 = vmax.f32 %v1445, 0.0
  %v1454 = vmax.f32 %v1446, 0.0
  %v1455 = vld [vmem:[%s1 + $0x78] sm:$0xff]
  %v1456 = vld [vmem:[%s1 + $0x80] sm:$0xff]
  %v1457 = vld [vmem:[%s1 + $0x88] sm:$0xff]
  %v1458 = vld [vmem:[%s1 + $0x90] sm:$0xff]
  %v1459 = vld [vmem:[%s1 + $0x98] sm:$0x1]
  %1468 = vrot.lane.b32.xlu0 %v1447, 16
  %v1469 = vpop.permute.xlu0 %1468
  %1470 = vrot.lane.b32.xlu0 %v1448, 16
  %v1471 = vpop.permute.xlu0 %1470
  %1472 = vrot.lane.b32.xlu0 %v1449, 16
  %v1473 = vpop.permute.xlu0 %1472
  %1474 = vrot.lane.b32.xlu0 %v1450, 16
  %v1475 = vpop.permute.xlu0 %1474
  %1476 = vrot.lane.b32.xlu0 %v1451, 16
  %v1477 = vpop.permute.xlu0 %1476
  %1478 = vrot.lane.b32.xlu0 %v1452, 16
  %v1479 = vpop.permute.xlu0 %1478
  %1480 = vrot.lane.b32.xlu0 %v1453, 16
  %v1481 = vpop.permute.xlu0 %1480
  %1482 = vrot.lane.b32.xlu0 %v1454, 16
  %v1483 = vpop.permute.xlu0 %1482
  %v1492 = vsel %vm1175, 0.0, %v1469
  %v1493 = vsel %vm1175, 0.0, %v1471
  %v1494 = vsel %vm1175, %v1447, %v1473
  %v1495 = vsel %vm1175, %v1448, %v1475
  %v1496 = vsel %vm1175, %v1449, %v1477
  %v1497 = vsel %vm1175, %v1450, %v1479
  %v1498 = vsel %vm1175, %v1451, %v1481
  %v1499 = vsel %vm1175, %v1452, %v1483
  %v1500 = vlaneseq
  %v1501 = vshrl.u32 %v1500, 7
  %v1502 = vsub.s32 0, %v1501
  %v1503 = vrot.slane %v1459, %v1502
  %v1505 = vsel %vm163, %v1492, 0
  %v1508 = vsel %vm163, %v1493, 0
  %v1511 = vsel %vm163, %v1494, 0
  %v1514 = vsel %vm163, %v1495, 0
  %v1517 = vsel %vm163, %v1496, 0
  %v1520 = vsel %vm163, %v1497, 0
  %v1523 = vsel %vm163, %v1498, 0
  %v1526 = vsel %vm163, %v1499, 0
  %1528 = vmatprep.subr.mxu0 0.0
  %1529 = vmatpush1.msra.mxu0 %v1455
  %1530 = vmatprep.subr.mxu0 0.0
  %1531 = vmatpush1.msra.mxu0 %v1456
  %1532 = vmatprep.subr.mxu0 0.0
  %1533 = vmatpush1.msra.mxu0 %v1457
  %1534 = vmatprep.subr.mxu0 0.0
  %1535 = vmatpush1.msra.mxu0 %v1458
  %1536 = vmatprep.subr.mxu0 0.0
  %1537 = vmatpush1.msra.mxu0 0.0
  %1538 = vmatprep.subr.mxu0 0.0
  %1539 = vmatpush1.msra.mxu0 0.0
  %1540 = vmatprep.subr.mxu0 0.0
  %1541 = vmatpush1.msra.mxu0 0.0
  %1542 = vmatprep.subr.mxu0 0.0
  %1543 = vmatpush1.msra.mxu0 0.0
  %1544 = vmatprep.subr.mxu0 0.0
  %1545 = vmatpush1.msra.mxu0 0.0
  %1546 = vmatprep.subr.mxu0 0.0
  %1547 = vmatpush1.msra.mxu0 0.0
  %1548 = vmatprep.subr.mxu0 0.0
  %1549 = vmatpush1.msra.mxu0 0.0
  %1550 = vmatprep.subr.mxu0 0.0
  %1551 = vmatpush1.msra.mxu0 0.0
  %1552 = vmatprep.subr.mxu0 0.0
  %1553 = vmatpush1.msra.mxu0 0.0
  %1554 = vmatprep.subr.mxu0 0.0
  %1555 = vmatpush1.msra.mxu0 0.0
  %1556 = vmatprep.subr.mxu0 0.0
  %1557 = vmatpush1.msra.mxu0 0.0
  %1558 = vmatprep.subr.mxu0 0.0
  %1559 = vmatpush1.msra.mxu0 0.0
  %1560 = vmatprep.subr.mxu0 0.0
  %1561 = vmatpush1.msra.mxu0 0.0
  %1562 = vmatprep.subr.mxu0 0.0
  %1563 = vmatpush1.msra.mxu0 0.0
  %1564 = vmatprep.subr.mxu0 0.0
  %1565 = vmatpush1.msra.mxu0 0.0
  %1566 = vmatprep.subr.mxu0 0.0
  %1567 = vmatpush1.msra.mxu0 0.0
  %1568 = vmatprep.subr.mxu0 0.0
  %1569 = vmatpush1.msra.mxu0 0.0
  %1570 = vmatprep.subr.mxu0 0.0
  %1571 = vmatpush1.msra.mxu0 0.0
  %1572 = vmatprep.subr.mxu0 0.0
  %1573 = vmatpush1.msra.mxu0 0.0
  %1574 = vmatprep.subr.mxu0 0.0
  %1575 = vmatpush1.msra.mxu0 0.0
  %1576 = vmatprep.subr.mxu0 0.0
  %1577 = vmatpush1.msra.mxu0 0.0
  %1578 = vmatprep.subr.mxu0 0.0
  %1579 = vmatpush1.msra.mxu0 0.0
  %1580 = vmatprep.subr.mxu0 0.0
  %1581 = vmatpush1.msra.mxu0 0.0
  %1582 = vmatprep.subr.mxu0 0.0
  %1583 = vmatpush1.msra.mxu0 0.0
  %1584 = vmatprep.subr.mxu0 0.0
  %1585 = vmatpush1.msra.mxu0 0.0
  %1586 = vmatprep.subr.mxu0 0.0
  %1587 = vmatpush1.msra.mxu0 0.0
  %1588 = vmatprep.subr.mxu0 0.0
  %1589 = vmatpush1.msra.mxu0 0.0
  %1590 = vmatprep.subr.mxu0 0.0
  %1591 = vmatpush1.msra.mxu0 0.0
  %1592 = vmatprep.mubr.f32.mxu0 0.0
  %1593 = vmatmul.mubr.f32.gmra.mrb[0].mxu0 %v1505
  %v1594 = vpop.f32.mrb[0].mxu0
  %v1595 = vadd.f32 %v1503, %v1594
  %v1596 = vpop.f32.mrb[0].mxu0
  %1597 = vmatprep.mubr.f32.mxu0 0.0
  %1598 = vmatmul.mubr.f32.gmra.mrb[0].mxu0 %v1508
  %v1599 = vpop.f32.mrb[0].mxu0
  %v1600 = vadd.f32 %v1503, %v1599
  %v1601 = vpop.f32.mrb[0].mxu0
  %1602 = vmatprep.mubr.f32.mxu0 0.0
  %1603 = vmatmul.mubr.f32.gmra.mrb[0].mxu0 %v1511
  %v1604 = vpop.f32.mrb[0].mxu0
  %v1605 = vadd.f32 %v1503, %v1604
  %v1606 = vpop.f32.mrb[0].mxu0
  %1607 = vmatprep.mubr.f32.mxu0 0.0
  %1608 = vmatmul.mubr.f32.gmra.mrb[0].mxu0 %v1514
  %v1609 = vpop.f32.mrb[0].mxu0
  %v1610 = vadd.f32 %v1503, %v1609
  %v1611 = vpop.f32.mrb[0].mxu0
  %1612 = vmatprep.mubr.f32.mxu0 0.0
  %1613 = vmatmul.mubr.f32.gmra.mrb[0].mxu0 %v1517
  %v1614 = vpop.f32.mrb[0].mxu0
  %v1615 = vadd.f32 %v1503, %v1614
  %v1616 = vpop.f32.mrb[0].mxu0
  %1617 = vmatprep.mubr.f32.mxu0 0.0
  %1618 = vmatmul.mubr.f32.gmra.mrb[0].mxu0 %v1520
  %v1619 = vpop.f32.mrb[0].mxu0
  %v1620 = vadd.f32 %v1503, %v1619
  %v1621 = vpop.f32.mrb[0].mxu0
  %1622 = vmatprep.mubr.f32.mxu0 0.0
  %1623 = vmatmul.mubr.f32.gmra.mrb[0].mxu0 %v1523
  %v1624 = vpop.f32.mrb[0].mxu0
  %v1625 = vadd.f32 %v1503, %v1624
  %v1626 = vpop.f32.mrb[0].mxu0
  %1627 = vmatprep.mubr.f32.mxu0 0.0
  %1628 = vmatmul.mubr.f32.gmra.mrb[0].mxu0 %v1526
  %v1629 = vpop.f32.mrb[0].mxu0
  %v1630 = vadd.f32 %v1503, %v1629
  %v1631 = vpop.f32.mrb[0].mxu0
  %1632 = vdwg.mxu0
  %v1633 = vmax.f32 %v1595, 0.0
  %v1634 = vmax.f32 %v1600, 0.0
  %v1635 = vmax.f32 %v1605, 0.0
  %v1636 = vmax.f32 %v1610, 0.0
  %v1637 = vmax.f32 %v1615, 0.0
  %v1638 = vmax.f32 %v1620, 0.0
  %v1639 = vmax.f32 %v1625, 0.0
  %v1640 = vmax.f32 %v1630, 0.0
  %v1641 = vld [vmem:[%s1 + $0xa0] sm:$0xff]
  %v1642 = vld [vmem:[%s1 + $0xa8] sm:$0xff]
  %v1643 = vld [vmem:[%s1 + $0xb0] sm:$0xff]
  %v1644 = vld [vmem:[%s1 + $0xb8] sm:$0xff]
  %v1645 = vld [vmem:[%s1 + $0xc0] sm:$0x1]
  %1654 = vrot.lane.b32.xlu0 %v1633, 16
  %v1655 = vpop.permute.xlu0 %1654
  %1656 = vrot.lane.b32.xlu0 %v1634, 16
  %v1657 = vpop.permute.xlu0 %1656
  %1658 = vrot.lane.b32.xlu0 %v1635, 16
  %v1659 = vpop.permute.xlu0 %1658
  %1660 = vrot.lane.b32.xlu0 %v1636, 16
  %v1661 = vpop.permute.xlu0 %1660
  %1662 = vrot.lane.b32.xlu0 %v1637, 16
  %v1663 = vpop.permute.xlu0 %1662
  %1664 = vrot.lane.b32.xlu0 %v1638, 16
  %v1665 = vpop.permute.xlu0 %1664
  %1666 = vrot.lane.b32.xlu0 %v1639, 16
  %v1667 = vpop.permute.xlu0 %1666
  %1668 = vrot.lane.b32.xlu0 %v1640, 16
  %v1669 = vpop.permute.xlu0 %1668
  %v1678 = vsel %vm1175, 0.0, %v1655
  %v1679 = vsel %vm1175, 0.0, %v1657
  %v1680 = vsel %vm1175, %v1633, %v1659
  %v1681 = vsel %vm1175, %v1634, %v1661
  %v1682 = vsel %vm1175, %v1635, %v1663
  %v1683 = vsel %vm1175, %v1636, %v1665
  %v1684 = vsel %vm1175, %v1637, %v1667
  %v1685 = vsel %vm1175, %v1638, %v1669
  %v1686 = vlaneseq
  %v1687 = vshrl.u32 %v1686, 7
  %v1688 = vsub.s32 0, %v1687
  %v1689 = vrot.slane %v1645, %v1688
  %v1691 = vsel %vm163, %v1678, 0
  %v1694 = vsel %vm163, %v1679, 0
  %v1697 = vsel %vm163, %v1680, 0
  %v1700 = vsel %vm163, %v1681, 0
  %v1703 = vsel %vm163, %v1682, 0
  %v1706 = vsel %vm163, %v1683, 0
  %v1709 = vsel %vm163, %v1684, 0
  %v1712 = vsel %vm163, %v1685, 0
  %1714 = vmatprep.subr.mxu0 0.0
  %1715 = vmatpush1.msra.mxu0 %v1641
  %1716 = vmatprep.subr.mxu0 0.0
  %1717 = vmatpush1.msra.mxu0 %v1642
  %1718 = vmatprep.subr.mxu0 0.0
  %1719 = vmatpush1.msra.mxu0 %v1643
  %1720 = vmatprep.subr.mxu0 0.0
  %1721 = vmatpush1.msra.mxu0 %v1644
  %1722 = vmatprep.subr.mxu0 0.0
  %1723 = vmatpush1.msra.mxu0 0.0
  %1724 = vmatprep.subr.mxu0 0.0
  %1725 = vmatpush1.msra.mxu0 0.0
  %1726 = vmatprep.subr.mxu0 0.0
  %1727 = vmatpush1.msra.mxu0 0.0
  %1728 = vmatprep.subr.mxu0 0.0
  %1729 = vmatpush1.msra.mxu0 0.0
  %1730 = vmatprep.subr.mxu0 0.0
  %1731 = vmatpush1.msra.mxu0 0.0
  %1732 = vmatprep.subr.mxu0 0.0
  %1733 = vmatpush1.msra.mxu0 0.0
  %1734 = vmatprep.subr.mxu0 0.0
  %1735 = vmatpush1.msra.mxu0 0.0
  %1736 = vmatprep.subr.mxu0 0.0
  %1737 = vmatpush1.msra.mxu0 0.0
  %1738 = vmatprep.subr.mxu0 0.0
  %1739 = vmatpush1.msra.mxu0 0.0
  %1740 = vmatprep.subr.mxu0 0.0
  %1741 = vmatpush1.msra.mxu0 0.0
  %1742 = vmatprep.subr.mxu0 0.0
  %1743 = vmatpush1.msra.mxu0 0.0
  %1744 = vmatprep.subr.mxu0 0.0
  %1745 = vmatpush1.msra.mxu0 0.0
  %1746 = vmatprep.subr.mxu0 0.0
  %1747 = vmatpush1.msra.mxu0 0.0
  %1748 = vmatprep.subr.mxu0 0.0
  %1749 = vmatpush1.msra.mxu0 0.0
  %1750 = vmatprep.subr.mxu0 0.0
  %1751 = vmatpush1.msra.mxu0 0.0
  %1752 = vmatprep.subr.mxu0 0.0
  %1753 = vmatpush1.msra.mxu0 0.0
  %1754 = vmatprep.subr.mxu0 0.0
  %1755 = vmatpush1.msra.mxu0 0.0
  %1756 = vmatprep.subr.mxu0 0.0
  %1757 = vmatpush1.msra.mxu0 0.0
  %1758 = vmatprep.subr.mxu0 0.0
  %1759 = vmatpush1.msra.mxu0 0.0
  %1760 = vmatprep.subr.mxu0 0.0
  %1761 = vmatpush1.msra.mxu0 0.0
  %1762 = vmatprep.subr.mxu0 0.0
  %1763 = vmatpush1.msra.mxu0 0.0
  %1764 = vmatprep.subr.mxu0 0.0
  %1765 = vmatpush1.msra.mxu0 0.0
  %1766 = vmatprep.subr.mxu0 0.0
  %1767 = vmatpush1.msra.mxu0 0.0
  %1768 = vmatprep.subr.mxu0 0.0
  %1769 = vmatpush1.msra.mxu0 0.0
  %1770 = vmatprep.subr.mxu0 0.0
  %1771 = vmatpush1.msra.mxu0 0.0
  %1772 = vmatprep.subr.mxu0 0.0
  %1773 = vmatpush1.msra.mxu0 0.0
  %1774 = vmatprep.subr.mxu0 0.0
  %1775 = vmatpush1.msra.mxu0 0.0
  %1776 = vmatprep.subr.mxu0 0.0
  %1777 = vmatpush1.msra.mxu0 0.0
  %1778 = vmatprep.mubr.f32.mxu0 0.0
  %1779 = vmatmul.mubr.f32.gmra.mrb[0].mxu0 %v1691
  %v1780 = vpop.f32.mrb[0].mxu0
  %v1781 = vpop.f32.mrb[0].mxu0
  %1782 = vmatprep.mubr.f32.mxu0 0.0
  %1783 = vmatmul.mubr.f32.gmra.mrb[0].mxu0 %v1694
  %v1784 = vpop.f32.mrb[0].mxu0
  %v1785 = vpop.f32.mrb[0].mxu0
  %1786 = vmatprep.mubr.f32.mxu0 0.0
  %1787 = vmatmul.mubr.f32.gmra.mrb[0].mxu0 %v1697
  %v1788 = vpop.f32.mrb[0].mxu0
  %v1789 = vpop.f32.mrb[0].mxu0
  %1790 = vmatprep.mubr.f32.mxu0 0.0
  %1791 = vmatmul.mubr.f32.gmra.mrb[0].mxu0 %v1700
  %v1792 = vpop.f32.mrb[0].mxu0
  %v1793 = vpop.f32.mrb[0].mxu0
  %1794 = vmatprep.mubr.f32.mxu0 0.0
  %1795 = vmatmul.mubr.f32.gmra.mrb[0].mxu0 %v1703
  %v1796 = vpop.f32.mrb[0].mxu0
  %v1797 = vpop.f32.mrb[0].mxu0
  %1798 = vmatprep.mubr.f32.mxu0 0.0
  %1799 = vmatmul.mubr.f32.gmra.mrb[0].mxu0 %v1706
  %v1800 = vpop.f32.mrb[0].mxu0
  %v1801 = vpop.f32.mrb[0].mxu0
  %1802 = vmatprep.mubr.f32.mxu0 0.0
  %1803 = vmatmul.mubr.f32.gmra.mrb[0].mxu0 %v1709
  %v1804 = vpop.f32.mrb[0].mxu0
  %v1805 = vpop.f32.mrb[0].mxu0
  %1806 = vmatprep.mubr.f32.mxu0 0.0
  %1807 = vmatmul.mubr.f32.gmra.mrb[0].mxu0 %v1712
  %v1808 = vpop.f32.mrb[0].mxu0
  %v1809 = vadd.f32 %v1689, %v1808
  %v1810 = vpop.f32.mrb[0].mxu0
  %1811 = vdwg.mxu0
  %v1812 = vmax.f32 %v1809, 0.0
  %v1813 = vadd.f32 %v1812, %v1454
  %v1814 = vmax.f32 %v1813, 0.0
  %1816 = vrot.lane.b32.xlu0 %v961, 32
  %v1817 = vpop.permute.xlu0 %1816
  %1820 = vrot.lane.b32.xlu0 %v1814, 32
  %v1821 = vpop.permute.xlu0 %1820
  %v1823 = vsel %vm163, %v1817, %v1821
  %v1824 = vld [vmem:[%s1 + $0xc8] sm:$0xff]
  %v1825 = vld [vmem:[%s1 + $0xd0] sm:$0xff]
  %v1826 = vld [vmem:[%s1 + $0xd8] sm:$0xff]
  %v1827 = vld [vmem:[%s1 + $0xe0] sm:$0xff]
  %v1828 = vld [vmem:[%s1 + $0xe8] sm:$0xff]
  %v1829 = vld [vmem:[%s1 + $0xf0] sm:$0xff]
  %v1830 = vld [vmem:[%s1 + $0xf8] sm:$0x1]
  %v1831 = vlaneseq
  %v1832 = vshrl.u32 %v1831, 7
  %v1833 = vsub.s32 0, %v1832
  %v1834 = vrot.slane %v1830, %v1833
  %vm1835 = vcmask 392192
  %v1837 = vsel %vm1835, %v1823, 0
  %1839 = vmatprep.subr.mxu0 0.0
  %1840 = vmatpush1.msra.mxu0 %v1824
  %1841 = vmatprep.subr.mxu0 0.0
  %1842 = vmatpush1.msra.mxu0 %v1825
  %1843 = vmatprep.subr.mxu0 0.0
  %1844 = vmatpush1.msra.mxu0 %v1826
  %1845 = vmatprep.subr.mxu0 0.0
  %1846 = vmatpush1.msra.mxu0 %v1827
  %1847 = vmatprep.subr.mxu0 0.0
  %1848 = vmatpush1.msra.mxu0 %v1828
  %1849 = vmatprep.subr.mxu0 0.0
  %1850 = vmatpush1.msra.mxu0 %v1829
  %1851 = vmatprep.subr.mxu0 0.0
  %1852 = vmatpush1.msra.mxu0 0.0
  %1853 = vmatprep.subr.mxu0 0.0
  %1854 = vmatpush1.msra.mxu0 0.0
  %1855 = vmatprep.subr.mxu0 0.0
  %1856 = vmatpush1.msra.mxu0 0.0
  %1857 = vmatprep.subr.mxu0 0.0
  %1858 = vmatpush1.msra.mxu0 0.0
  %1859 = vmatprep.subr.mxu0 0.0
  %1860 = vmatpush1.msra.mxu0 0.0
  %1861 = vmatprep.subr.mxu0 0.0
  %1862 = vmatpush1.msra.mxu0 0.0
  %1863 = vmatprep.subr.mxu0 0.0
  %1864 = vmatpush1.msra.mxu0 0.0
  %1865 = vmatprep.subr.mxu0 0.0
  %1866 = vmatpush1.msra.mxu0 0.0
  %1867 = vmatprep.subr.mxu0 0.0
  %1868 = vmatpush1.msra.mxu0 0.0
  %1869 = vmatprep.subr.mxu0 0.0
  %1870 = vmatpush1.msra.mxu0 0.0
  %1871 = vmatprep.subr.mxu0 0.0
  %1872 = vmatpush1.msra.mxu0 0.0
  %1873 = vmatprep.subr.mxu0 0.0
  %1874 = vmatpush1.msra.mxu0 0.0
  %1875 = vmatprep.subr.mxu0 0.0
  %1876 = vmatpush1.msra.mxu0 0.0
  %1877 = vmatprep.subr.mxu0 0.0
  %1878 = vmatpush1.msra.mxu0 0.0
  %1879 = vmatprep.subr.mxu0 0.0
  %1880 = vmatpush1.msra.mxu0 0.0
  %1881 = vmatprep.subr.mxu0 0.0
  %1882 = vmatpush1.msra.mxu0 0.0
  %1883 = vmatprep.subr.mxu0 0.0
  %1884 = vmatpush1.msra.mxu0 0.0
  %1885 = vmatprep.subr.mxu0 0.0
  %1886 = vmatpush1.msra.mxu0 0.0
  %1887 = vmatprep.subr.mxu0 0.0
  %1888 = vmatpush1.msra.mxu0 0.0
  %1889 = vmatprep.subr.mxu0 0.0
  %1890 = vmatpush1.msra.mxu0 0.0
  %1891 = vmatprep.subr.mxu0 0.0
  %1892 = vmatpush1.msra.mxu0 0.0
  %1893 = vmatprep.subr.mxu0 0.0
  %1894 = vmatpush1.msra.mxu0 0.0
  %1895 = vmatprep.subr.mxu0 0.0
  %1896 = vmatpush1.msra.mxu0 0.0
  %1897 = vmatprep.subr.mxu0 0.0
  %1898 = vmatpush1.msra.mxu0 0.0
  %1899 = vmatprep.subr.mxu0 0.0
  %1900 = vmatpush1.msra.mxu0 0.0
  %1901 = vmatprep.subr.mxu0 0.0
  %1902 = vmatpush1.msra.mxu0 0.0
  %1903 = vmatprep.mubr.f32.mxu0 0.0
  %1904 = vmatmul.mubr.f32.gmra.mrb[0].mxu0 %v1837
  %v1905 = vpop.f32.mrb[0].mxu0
  %v1906 = vadd.f32 %v1834, %v1905
  %v1907 = vpop.f32.mrb[0].mxu0
  %1908 = vdwg.mxu0
  %1909 = vst [vmem:[%s2] sm:$0xff] %v1906
  // Predicated region
  $region10: #{run_forecaster.1} parent=0 // pred_check
    _
  $region11: #{run_forecaster.1} parent=0 // pred_check_branch
    %1911 = sbr.rel (0) target = $region13
  $region12: #{run_forecaster.1} parent=0 // pred_region
    _
  $region13: #{run_forecaster.1} parent=0 // pred_fallthru
    _
  // Predicated region
  $region14: #{run_forecaster.1} parent=0 // pred_check
    _
  $region15: #{run_forecaster.1} parent=0 // pred_check_branch
    %1913 = sbr.rel (0) target = $region17
  $region16: #{run_forecaster.1} parent=0 // pred_region
    _
  $region17: #{run_forecaster.1} parent=0 // pred_fallthru
    _

</llo_original>
